<compile_context>
chip_gen: v7x
topology: tpu7x:2x2x1
jax: 0.10.0
libtpu: 0.0.40
codegen_flags: <defaults>
</compile_context>

<pallas_src>
import functools

import jax
import jax.numpy as jnp
import numpy as np
from jax.experimental import pallas as pl
from jax.experimental.pallas import tpu as pltpu

LANE = 128


def _round_up(v, m):
    return (v + m - 1) // m * m


# --------------------------------------------------------------------------
# Kernels
# --------------------------------------------------------------------------
def _proj_root_kernel(x_ref, wl_ref, wr_ref, b_ref, p_ref, root_ref):
    """Fused per-row-tile projections:
         p    = x @ W_l       (bf16, feeds the neighbor aggregation)
         root = x @ W_r + b   (f32, feeds the aggregation epilogue)
    """
    x = x_ref[...]
    p_ref[...] = jnp.dot(x, wl_ref[...],
                         preferred_element_type=jnp.float32).astype(p_ref.dtype)
    root = jnp.dot(x, wr_ref[...], preferred_element_type=jnp.float32) + b_ref[...]
    root_ref[...] = root.astype(root_ref.dtype)


def _sage_agg_kernel(cids_ref, cnts_ref, adj_ref, p_ref, root_ref, dinv_ref,
                     o_ref, acc_ref, *, apply_relu):
    """Block-sparse mean aggregation + epilogue for one output row tile.

    acc += adj_tile(bf16 counts) @ p_tile(bf16)      # MXU, f32 accumulate
    finalize: out = [relu]( acc * (1/deg) + root )
    Only adjacency tiles listed in the prefetched schedule are multiplied.
    """
    i = pl.program_id(0)
    k = pl.program_id(1)

    @pl.when(k == 0)
    def _():
        acc_ref[...] = jnp.zeros_like(acc_ref)

    @pl.when(k < cnts_ref[i])
    def _():
        acc_ref[...] += jnp.dot(adj_ref[...], p_ref[...],
                                preferred_element_type=jnp.float32)

    @pl.when(k == pl.num_programs(1) - 1)
    def _():
        out = acc_ref[...] * dinv_ref[...] + root_ref[...].astype(jnp.float32)
        if apply_relu:
            out = jnp.maximum(out, 0.0)
        o_ref[...] = out.astype(o_ref.dtype)


# --------------------------------------------------------------------------
# pallas_call wrappers
# --------------------------------------------------------------------------
def _project_and_root(x, wl, wr, b, *, tm):
    """One fused pass over x: returns (p bf16, root f32), both (npad, hdim)."""
    npad, fdim = x.shape
    hdim = wl.shape[1]
    return pl.pallas_call(
        _proj_root_kernel,
        out_shape=(jax.ShapeDtypeStruct((npad, hdim), jnp.bfloat16),
                   jax.ShapeDtypeStruct((npad, hdim), jnp.float32)),
        grid_spec=pltpu.PrefetchScalarGridSpec(
            num_scalar_prefetch=0,
            grid=(npad // tm,),
            in_specs=[pl.BlockSpec((tm, fdim), lambda i: (i, 0)),
                      pl.BlockSpec((fdim, hdim), lambda i: (0, 0)),   # W_l resident
                      pl.BlockSpec((fdim, hdim), lambda i: (0, 0)),   # W_r resident
                      pl.BlockSpec((1, hdim), lambda i: (0, 0))],     # bias resident
            out_specs=(pl.BlockSpec((tm, hdim), lambda i: (i, 0)),
                       pl.BlockSpec((tm, hdim), lambda i: (i, 0))),
        ),
        compiler_params=pltpu.CompilerParams(dimension_semantics=("parallel",)),
    )(x, wl, wr, b)


def _sage_layer(adj, dinv, col_ids, nz_counts, p, root, *, apply_relu,
                tm, tk, out_dtype):
    npad = adj.shape[0]
    hdim = p.shape[1]
    row_tiles, kmax = col_ids.shape

    flops = 2 * row_tiles * kmax * tm * tk * hdim
    bytes_accessed = (row_tiles * kmax * (tm * tk * adj.dtype.itemsize
                                          + tk * hdim * p.dtype.itemsize)
                      + root.size * root.dtype.itemsize
                      + npad * hdim * jnp.dtype(out_dtype).itemsize)

    kernel = functools.partial(_sage_agg_kernel, apply_relu=apply_relu)
    return pl.pallas_call(
        kernel,
        out_shape=jax.ShapeDtypeStruct((npad, hdim), out_dtype),
        grid_spec=pltpu.PrefetchScalarGridSpec(
            num_scalar_prefetch=2,           # col_ids, nz_counts -> SMEM
            grid=(row_tiles, kmax),
            in_specs=[
                # adjacency tile: data-dependent column-tile index
                pl.BlockSpec((tm, tk), lambda i, k, cids, cnts: (i, cids[i, k])),
                # projected neighbor features for that column tile
                pl.BlockSpec((tk, hdim), lambda i, k, cids, cnts: (cids[i, k], 0)),
                # precomputed root (+bias) tile, resident across the reduction
                pl.BlockSpec((tm, hdim), lambda i, k, cids, cnts: (i, 0)),
                # 1/deg row scale
                pl.BlockSpec((tm, 1), lambda i, k, cids, cnts: (i, 0)),
            ],
            out_specs=pl.BlockSpec((tm, hdim), lambda i, k, cids, cnts: (i, 0)),
            scratch_shapes=[pltpu.VMEM((tm, hdim), jnp.float32)],
        ),
        compiler_params=pltpu.CompilerParams(
            dimension_semantics=("parallel", "arbitrary")),
        cost_estimate=pl.CostEstimate(flops=flops, transcendentals=0,
                                      bytes_accessed=bytes_accessed),
    )(col_ids, nz_counts, adj, p, root, dinv)


# --------------------------------------------------------------------------
# Forward pass
# --------------------------------------------------------------------------
@functools.partial(jax.jit, static_argnames=("tm", "tk"))
def graphsage_forward(adj, dinv, col_ids, nz_counts, x_pad, params, *, tm, tk):
    """adj: (Npad,Npad) bf16 edge counts; dinv: (Npad,1) f32; x_pad: (Npad,Fpad) bf16."""
    # ---- SAGEConv 1: fused project/root -> block-sparse aggregate -> ReLU ----
    p1, r1 = _project_and_root(x_pad, params["w1l"], params["w1r"], params["b1"], tm=tm)
    h = _sage_layer(adj, dinv, col_ids, nz_counts, p1, r1,
                    apply_relu=True, tm=tm, tk=tk, out_dtype=jnp.bfloat16)
    # F.dropout(p=0.2, training=False) is the identity.
    # TODO(synk): training-mode dropout (pltpu.prng_random_bits mask) not implemented.

    # ---- SAGEConv 2 ----
    p2, r2 = _project_and_root(h, params["w2l"], params["w2r"], params["b2"], tm=tm)
    out = _sage_layer(adj, dinv, col_ids, nz_counts, p2, r2,
                      apply_relu=False, tm=tm, tk=tk, out_dtype=jnp.float32)
    return out


# --------------------------------------------------------------------------
# Graph / parameter preparation (hoisted out of the per-call path)
# --------------------------------------------------------------------------
def _pick_tiles(npad):
    """Choose (tm, tk) dividing npad.  tk is a multiple of 128 (>=256 when the
    graph is big enough); tm prefers >= 2 row tiles so the 'parallel' grid axis
    can split across v7x's two TensorCores."""
    tk = next(c for c in (512, 256, 128) if npad % c == 0)
    cands = [c for c in (512, 256, 128, 64) if npad % c == 0]
    tm = next((c for c in cands if npad // c >= 2), cands[-1])
    return tm, tk


def build_graph_operators(edge_index, n, npad, tm, tk):
    """Unnormalized padded edge-count adjacency (bf16-exact small ints), 1/deg,
    and the block-sparse tile schedule.  Host/numpy work, done once per graph."""
    src = np.asarray(edge_index[0])
    dst = np.asarray(edge_index[1])
    counts = np.zeros((n, n), np.float32)
    np.add.at(counts, (dst, src), 1.0)
    assert counts.max() < 256, "edge multiplicity too large for exact bf16 counts"
    deg = counts.sum(axis=1, keepdims=True)
    dinv = 1.0 / np.maximum(deg, 1.0)

    adj_np = np.zeros((npad, npad), np.float32)
    adj_np[:n, :n] = counts
    dinv_np = np.zeros((npad, 1), np.float32)
    dinv_np[:n] = dinv

    # Tile-level nonzero structure: per row tile, the list of nonzero column tiles.
    row_tiles, col_tiles = npad // tm, npad // tk
    blk = adj_np.reshape(row_tiles, tm, col_tiles, tk).any(axis=(1, 3))
    nz_counts = blk.sum(axis=1).astype(np.int32)
    kmax = max(int(nz_counts.max()), 1)
    col_ids = np.zeros((row_tiles, kmax), np.int32)
    for i in range(row_tiles):
        nz = np.nonzero(blk[i])[0].astype(np.int32)
        col_ids[i, :nz.size] = nz
        if nz.size:                        # pad by repeating the last valid tile:
            col_ids[i, nz.size:] = nz[-1]  # same block index => no re-DMA

    # TODO(synk): int8 adjacency (v5e/v6e) or fp8-e4m3 (v7x, no integer MXU) would
    # halve the dominant adj stream again; kept bf16 for a single portable dtype.
    return (jnp.asarray(adj_np, dtype=jnp.bfloat16),
            jnp.asarray(dinv_np),
            jnp.asarray(col_ids),
            jnp.asarray(nz_counts))


def init_params(key, num_node_features, hidden, num_classes):
    """Deterministic synthetic weights matching SAGEConv shapes.

    Stored pre-transposed (in_dim, out_dim) so kernels do x @ W directly.
    lin_l (neighbor) carries the bias, lin_r (root) has no bias — PyG default.
    """
    ks = jax.random.split(key, 4)
    s1 = 1.0 / jnp.sqrt(num_node_features)
    s2 = 1.0 / jnp.sqrt(hidden)
    return {
        "w1l": jax.random.uniform(ks[0], (num_node_features, hidden), jnp.float32, -s1, s1),
        "w1r": jax.random.uniform(ks[1], (num_node_features, hidden), jnp.float32, -s1, s1),
        "b1": jnp.zeros((1, hidden), jnp.float32),
        "w2l": jax.random.uniform(ks[2], (hidden, num_classes), jnp.float32, -s2, s2),
        "w2r": jax.random.uniform(ks[3], (hidden, num_classes), jnp.float32, -s2, s2),
        "b2": jnp.zeros((1, num_classes), jnp.float32),
    }


def pad_params(params, fp, hp, cp):
    """Zero-pad feature dims to 128 lanes; weights -> bf16 (MXU operand dtype),
    biases stay f32 (added on the f32 epilogue path).  Padding is exact math."""
    def pad2(w, r, c, dt):
        out = jnp.zeros((r, c), jnp.float32).at[:w.shape[0], :w.shape[1]].set(w)
        return out.astype(dt)
    return {
        "w1l": pad2(params["w1l"], fp, hp, jnp.bfloat16),
        "w1r": pad2(params["w1r"], fp, hp, jnp.bfloat16),
        "b1":  pad2(params["b1"], 1, hp, jnp.float32),
        "w2l": pad2(params["w2l"], hp, cp, jnp.bfloat16),
        "w2r": pad2(params["w2r"], hp, cp, jnp.bfloat16),
        "b2":  pad2(params["b2"], 1, cp, jnp.float32),
    }


def _reference(x, edge_index, params):
    """Pure-JAX f32 reference (PyG mean-aggr SAGEConv semantics)."""
    n = x.shape[0]
    src, dst = edge_index[0], edge_index[1]
    adj = jnp.zeros((n, n), jnp.float32).at[dst, src].add(1.0)
    adj = adj / jnp.maximum(adj.sum(axis=1, keepdims=True), 1.0)
    h = adj @ x @ params["w1l"] + x @ params["w1r"] + params["b1"]
    h = jnp.maximum(h, 0.0)
    return adj @ h @ params["w2l"] + h @ params["w2r"] + params["b2"]


if __name__ == "__main__":
    key = jax.random.PRNGKey(0)
    k_x, k_e, k_p = jax.random.split(key, 3)

    N = 64                  # nodes
    F_IN = 32               # num_node_features
    HIDDEN = 16             # SAGEConv hidden size (from module)
    NUM_CLASSES = 8
    E = 256                 # edges

    x = jax.random.normal(k_x, (N, F_IN), jnp.float32)
    edge_index = jax.random.randint(k_e, (2, E), 0, N, jnp.int32)
    params = init_params(k_p, F_IN, HIDDEN, NUM_CLASSES)

    # Pad only to the layout minimum (128 lanes); no over-padding of small graphs.
    npad = _round_up(N, LANE)
    fp = _round_up(F_IN, LANE)
    hp = _round_up(HIDDEN, LANE)
    cp = _round_up(NUM_CLASSES, LANE)
    tm, tk = _pick_tiles(npad)
    assert npad % tm == 0 and npad % tk == 0

    adj, dinv, col_ids, nz_counts = build_graph_operators(edge_index, N, npad, tm, tk)
    x_pad = jnp.zeros((npad, fp), jnp.bfloat16).at[:N, :F_IN].set(
        x.astype(jnp.bfloat16))
    pparams = pad_params(params, fp, hp, cp)

    out_pad = graphsage_forward(adj, dinv, col_ids, nz_counts, x_pad, pparams,
                                tm=tm, tk=tk)
    out_pad = jax.block_until_ready(out_pad)
    out = out_pad[:N, :NUM_CLASSES]

    ref = _reference(x, edge_index, params)
    assert out.shape == (N, NUM_CLASSES)
    max_err = float(jnp.max(jnp.abs(out - ref)))
    # Tolerance accounts for bf16 inputs/weights/activations + matmul reassociation.
    assert jnp.allclose(out, ref, atol=5e-2, rtol=5e-2), \
        f"mismatch vs reference (max abs err {max_err})"

    print("KERNEL_OK")
</pallas_src>

<mosaic_0001>
module attributes {stable_mosaic.version = 11 : i64} {
  func.func @_proj_root_kernel(%arg0: i32, %arg1: memref<64x128xbf16, #tpu.memory_space<vmem>>, %arg2: memref<128x128xbf16, #tpu.memory_space<vmem>>, %arg3: memref<128x128xbf16, #tpu.memory_space<vmem>>, %arg4: memref<1x128xf32, #tpu.memory_space<vmem>>, %arg5: memref<64x128xbf16, #tpu.memory_space<vmem>>, %arg6: memref<64x128xf32, #tpu.memory_space<vmem>>) attributes {dimension_semantics = [#tpu.dimension_semantics<parallel>], iteration_bounds = array<i64: 2>, scalar_prefetch = 0 : i64, scratch_operands = 0 : i64, tpu.core_type = #tpu.core_type<tc>, window_params = [{transform_indices = @transform_0, window_bounds = array<i64: 64, 128>}, {pipeline_mode = #tpu.pipeline_mode<synchronous>, transform_indices = @transform_1, window_bounds = array<i64: 128, 128>}, {pipeline_mode = #tpu.pipeline_mode<synchronous>, transform_indices = @transform_2, window_bounds = array<i64: 128, 128>}, {pipeline_mode = #tpu.pipeline_mode<synchronous>, transform_indices = @transform_3, window_bounds = array<i64: 1, 128>}, {transform_indices = @transform_4, window_bounds = array<i64: 64, 128>}, {transform_indices = @transform_5, window_bounds = array<i64: 64, 128>}]} {
    %c0 = arith.constant 0 : index
    %c0_0 = arith.constant 0 : index
    %0 = vector.load %arg1[%c0, %c0_0] : memref<64x128xbf16, #tpu.memory_space<vmem>>, vector<64x128xbf16>
    %c0_1 = arith.constant 0 : index
    %c0_2 = arith.constant 0 : index
    %1 = vector.load %arg2[%c0_1, %c0_2] : memref<128x128xbf16, #tpu.memory_space<vmem>>, vector<128x128xbf16>
    %cst = arith.constant dense<0.000000e+00> : vector<64x128xf32>
    %2 = tpu.matmul %0, %1, %cst {dimension_numbers = #tpu.dot_dimension_numbers<[1], [0], [0], [1], [0, 0, 1, 1], [], []>} : vector<64x128xbf16>, vector<128x128xbf16>, vector<64x128xf32> -> vector<64x128xf32>
    %3 = arith.truncf %2 : vector<64x128xf32> to vector<64x128xbf16>
    %c0_3 = arith.constant 0 : index
    %c0_4 = arith.constant 0 : index
    %4 = vector.load %arg5[%c0_3, %c0_4] : memref<64x128xbf16, #tpu.memory_space<vmem>>, vector<64x128xbf16>
    tpu.vector_store %arg5[%c0_3, %c0_4], %3 {strides = array<i32>} : memref<64x128xbf16, #tpu.memory_space<vmem>>, vector<64x128xbf16>,
    %c0_5 = arith.constant 0 : index
    %c0_6 = arith.constant 0 : index
    %5 = vector.load %arg3[%c0_5, %c0_6] : memref<128x128xbf16, #tpu.memory_space<vmem>>, vector<128x128xbf16>
    %cst_7 = arith.constant dense<0.000000e+00> : vector<64x128xf32>
    %6 = tpu.matmul %0, %5, %cst_7 {dimension_numbers = #tpu.dot_dimension_numbers<[1], [0], [0], [1], [0, 0, 1, 1], [], []>} : vector<64x128xbf16>, vector<128x128xbf16>, vector<64x128xf32> -> vector<64x128xf32>
    %c0_8 = arith.constant 0 : index
    %c0_9 = arith.constant 0 : index
    %7 = vector.load %arg4[%c0_8, %c0_9] : memref<1x128xf32, #tpu.memory_space<vmem>>, vector<1x128xf32>
    %8 = vector.broadcast %7 : vector<1x128xf32> to vector<64x128xf32>
    %9 = arith.addf %6, %8 : vector<64x128xf32>
    %c0_10 = arith.constant 0 : index
    %c0_11 = arith.constant 0 : index
    %10 = vector.load %arg6[%c0_10, %c0_11] : memref<64x128xf32, #tpu.memory_space<vmem>>, vector<64x128xf32>
    tpu.vector_store %arg6[%c0_10, %c0_11], %9 {strides = array<i32>} : memref<64x128xf32, #tpu.memory_space<vmem>>, vector<64x128xf32>,
    return
  }
  func.func @transform_0(%arg0: i32) -> (i32, i32) {
    %c0_i32 = arith.constant 0 : i32
    %c0_i32_0 = arith.constant 0 : i32
    return %arg0, %c0_i32 : i32, i32
  }
  func.func @transform_1(%arg0: i32) -> (i32, i32) {
    %c0_i32 = arith.constant 0 : i32
    %c0_i32_0 = arith.constant 0 : i32
    %c0_i32_1 = arith.constant 0 : i32
    return %c0_i32, %c0_i32_0 : i32, i32
  }
  func.func @transform_2(%arg0: i32) -> (i32, i32) {
    %c0_i32 = arith.constant 0 : i32
    %c0_i32_0 = arith.constant 0 : i32
    %c0_i32_1 = arith.constant 0 : i32
    return %c0_i32, %c0_i32_0 : i32, i32
  }
  func.func @transform_3(%arg0: i32) -> (i32, i32) {
    %c0_i32 = arith.constant 0 : i32
    %c0_i32_0 = arith.constant 0 : i32
    %c0_i32_1 = arith.constant 0 : i32
    return %c0_i32, %c0_i32_0 : i32, i32
  }
  func.func @transform_4(%arg0: i32) -> (i32, i32) {
    %c0_i32 = arith.constant 0 : i32
    %c0_i32_0 = arith.constant 0 : i32
    return %arg0, %c0_i32 : i32, i32
  }
  func.func @transform_5(%arg0: i32) -> (i32, i32) {
    %c0_i32 = arith.constant 0 : i32
    %c0_i32_0 = arith.constant 0 : i32
    return %arg0, %c0_i32 : i32, i32
  }
}

module attributes {stable_mosaic.version = 11 : i64} {
  func.func @_sage_agg_kernel(%arg0: i32, %arg1: i32, %arg2: memref<2x1xi32, #tpu.memory_space<smem>>, %arg3: memref<2xi32, #tpu.memory_space<smem>>, %arg4: memref<64x128xbf16, #tpu.memory_space<vmem>>, %arg5: memref<128x128xbf16, #tpu.memory_space<vmem>>, %arg6: memref<64x128xf32, #tpu.memory_space<vmem>>, %arg7: memref<64x1xf32, #tpu.memory_space<vmem>>, %arg8: memref<64x128xbf16, #tpu.memory_space<vmem>>, %arg9: memref<64x128xf32, #tpu.memory_space<vmem>>) attributes {dimension_semantics = [#tpu.dimension_semantics<parallel>, #tpu.dimension_semantics<arbitrary>], iteration_bounds = array<i64: 2, 1>, scalar_prefetch = 2 : i64, scratch_operands = 1 : i64, tpu.core_type = #tpu.core_type<tc>, window_params = [{transform_indices = @transform_0, window_bounds = array<i64: 64, 128>}, {transform_indices = @transform_1, window_bounds = array<i64: 128, 128>}, {transform_indices = @transform_2, window_bounds = array<i64: 64, 128>}, {transform_indices = @transform_3, window_bounds = array<i64: 64, 1>}, {transform_indices = @transform_4, window_bounds = array<i64: 64, 128>}]} {
    %c0_i32 = arith.constant 0 : i32
    %0 = arith.cmpi eq, %arg1, %c0_i32 : i32
    %1 = arith.extui %0 : i1 to i32
    %c0_i32_0 = arith.constant 0 : i32
    %2 = arith.cmpi ne, %1, %c0_i32_0 : i32
    scf.if %2 {
      %cst = arith.constant 0.000000e+00 : f32
      %11 = vector.broadcast %cst : f32 to vector<64x128xf32>
      %c0 = arith.constant 0 : index
      %c0_4 = arith.constant 0 : index
      %12 = vector.load %arg9[%c0, %c0_4] : memref<64x128xf32, #tpu.memory_space<vmem>>, vector<64x128xf32>
      tpu.vector_store %arg9[%c0, %c0_4], %11 {strides = array<i32>} : memref<64x128xf32, #tpu.memory_space<vmem>>, vector<64x128xf32>,
    } else {
    }
    %3 = arith.index_cast %arg0 : i32 to index
    %4 = memref.load %arg3[%3] : memref<2xi32, #tpu.memory_space<smem>>
    %5 = arith.cmpi slt, %arg1, %4 : i32
    %6 = arith.extui %5 : i1 to i32
    %c0_i32_1 = arith.constant 0 : i32
    %7 = arith.cmpi ne, %6, %c0_i32_1 : i32
    scf.if %7 {
      %c0 = arith.constant 0 : index
      %c0_4 = arith.constant 0 : index
      %11 = vector.load %arg9[%c0, %c0_4] : memref<64x128xf32, #tpu.memory_space<vmem>>, vector<64x128xf32>
      %c0_5 = arith.constant 0 : index
      %c0_6 = arith.constant 0 : index
      %12 = vector.load %arg4[%c0_5, %c0_6] : memref<64x128xbf16, #tpu.memory_space<vmem>>, vector<64x128xbf16>
      %c0_7 = arith.constant 0 : index
      %c0_8 = arith.constant 0 : index
      %13 = vector.load %arg5[%c0_7, %c0_8] : memref<128x128xbf16, #tpu.memory_space<vmem>>, vector<128x128xbf16>
      %cst = arith.constant dense<0.000000e+00> : vector<64x128xf32>
      %14 = tpu.matmul %12, %13, %cst {dimension_numbers = #tpu.dot_dimension_numbers<[1], [0], [0], [1], [0, 0, 1, 1], [], []>} : vector<64x128xbf16>, vector<128x128xbf16>, vector<64x128xf32> -> vector<64x128xf32>
      %15 = arith.addf %11, %14 : vector<64x128xf32>
      %c0_9 = arith.constant 0 : index
      %c0_10 = arith.constant 0 : index
      %16 = vector.load %arg9[%c0_9, %c0_10] : memref<64x128xf32, #tpu.memory_space<vmem>>, vector<64x128xf32>
      tpu.vector_store %arg9[%c0_9, %c0_10], %15 {strides = array<i32>} : memref<64x128xf32, #tpu.memory_space<vmem>>, vector<64x128xf32>,
    } else {
    }
    %c0_i32_2 = arith.constant 0 : i32
    %8 = arith.cmpi eq, %arg1, %c0_i32_2 : i32
    %9 = arith.extui %8 : i1 to i32
    %c0_i32_3 = arith.constant 0 : i32
    %10 = arith.cmpi ne, %9, %c0_i32_3 : i32
    scf.if %10 {
      %c0 = arith.constant 0 : index
      %c0_4 = arith.constant 0 : index
      %11 = vector.load %arg9[%c0, %c0_4] : memref<64x128xf32, #tpu.memory_space<vmem>>, vector<64x128xf32>
      %c0_5 = arith.constant 0 : index
      %c0_6 = arith.constant 0 : index
      %12 = vector.load %arg7[%c0_5, %c0_6] : memref<64x1xf32, #tpu.memory_space<vmem>>, vector<64x1xf32>
      %13 = vector.broadcast %12 : vector<64x1xf32> to vector<64x128xf32>
      %14 = arith.mulf %11, %13 : vector<64x128xf32>
      %c0_7 = arith.constant 0 : index
      %c0_8 = arith.constant 0 : index
      %15 = vector.load %arg6[%c0_7, %c0_8] : memref<64x128xf32, #tpu.memory_space<vmem>>, vector<64x128xf32>
      %16 = arith.addf %14, %15 : vector<64x128xf32>
      %cst = arith.constant 0.000000e+00 : f32
      %17 = vector.broadcast %cst : f32 to vector<64x128xf32>
      %18 = arith.maximumf %16, %17 : vector<64x128xf32>
      %19 = arith.truncf %18 : vector<64x128xf32> to vector<64x128xbf16>
      %c0_9 = arith.constant 0 : index
      %c0_10 = arith.constant 0 : index
      %20 = vector.load %arg8[%c0_9, %c0_10] : memref<64x128xbf16, #tpu.memory_space<vmem>>, vector<64x128xbf16>
      tpu.vector_store %arg8[%c0_9, %c0_10], %19 {strides = array<i32>} : memref<64x128xbf16, #tpu.memory_space<vmem>>, vector<64x128xbf16>,
    } else {
    }
    return
  }
  func.func @transform_0(%arg0: i32, %arg1: i32, %arg2: memref<2x1xi32, #tpu.memory_space<smem>>, %arg3: memref<2xi32, #tpu.memory_space<smem>>) -> (i32, i32) {
    %0 = arith.index_cast %arg0 : i32 to index
    %1 = arith.index_cast %arg1 : i32 to index
    %2 = memref.load %arg2[%0, %1] : memref<2x1xi32, #tpu.memory_space<smem>>
    %c0_i32 = arith.constant 0 : i32
    return %arg0, %2 : i32, i32
  }
  func.func @transform_1(%arg0: i32, %arg1: i32, %arg2: memref<2x1xi32, #tpu.memory_space<smem>>, %arg3: memref<2xi32, #tpu.memory_space<smem>>) -> (i32, i32) {
    %0 = arith.index_cast %arg0 : i32 to index
    %1 = arith.index_cast %arg1 : i32 to index
    %2 = memref.load %arg2[%0, %1] : memref<2x1xi32, #tpu.memory_space<smem>>
    %c0_i32 = arith.constant 0 : i32
    %c0_i32_0 = arith.constant 0 : i32
    return %2, %c0_i32 : i32, i32
  }
  func.func @transform_2(%arg0: i32, %arg1: i32, %arg2: memref<2x1xi32, #tpu.memory_space<smem>>, %arg3: memref<2xi32, #tpu.memory_space<smem>>) -> (i32, i32) {
    %c0_i32 = arith.constant 0 : i32
    %c0_i32_0 = arith.constant 0 : i32
    return %arg0, %c0_i32 : i32, i32
  }
  func.func @transform_3(%arg0: i32, %arg1: i32, %arg2: memref<2x1xi32, #tpu.memory_space<smem>>, %arg3: memref<2xi32, #tpu.memory_space<smem>>) -> (i32, i32) {
    %c0_i32 = arith.constant 0 : i32
    %c0_i32_0 = arith.constant 0 : i32
    return %arg0, %c0_i32 : i32, i32
  }
  func.func @transform_4(%arg0: i32, %arg1: i32, %arg2: memref<2x1xi32, #tpu.memory_space<smem>>, %arg3: memref<2xi32, #tpu.memory_space<smem>>) -> (i32, i32) {
    %c0_i32 = arith.constant 0 : i32
    %c0_i32_0 = arith.constant 0 : i32
    return %arg0, %c0_i32 : i32, i32
  }
}

module attributes {stable_mosaic.version = 11 : i64} {
  func.func @_proj_root_kernel(%arg0: i32, %arg1: memref<64x128xbf16, #tpu.memory_space<vmem>>, %arg2: memref<128x128xbf16, #tpu.memory_space<vmem>>, %arg3: memref<128x128xbf16, #tpu.memory_space<vmem>>, %arg4: memref<1x128xf32, #tpu.memory_space<vmem>>, %arg5: memref<64x128xbf16, #tpu.memory_space<vmem>>, %arg6: memref<64x128xf32, #tpu.memory_space<vmem>>) attributes {dimension_semantics = [#tpu.dimension_semantics<parallel>], iteration_bounds = array<i64: 2>, scalar_prefetch = 0 : i64, scratch_operands = 0 : i64, tpu.core_type = #tpu.core_type<tc>, window_params = [{transform_indices = @transform_0, window_bounds = array<i64: 64, 128>}, {pipeline_mode = #tpu.pipeline_mode<synchronous>, transform_indices = @transform_1, window_bounds = array<i64: 128, 128>}, {pipeline_mode = #tpu.pipeline_mode<synchronous>, transform_indices = @transform_2, window_bounds = array<i64: 128, 128>}, {pipeline_mode = #tpu.pipeline_mode<synchronous>, transform_indices = @transform_3, window_bounds = array<i64: 1, 128>}, {transform_indices = @transform_4, window_bounds = array<i64: 64, 128>}, {transform_indices = @transform_5, window_bounds = array<i64: 64, 128>}]} {
    %c0 = arith.constant 0 : index
    %c0_0 = arith.constant 0 : index
    %0 = vector.load %arg1[%c0, %c0_0] : memref<64x128xbf16, #tpu.memory_space<vmem>>, vector<64x128xbf16>
    %c0_1 = arith.constant 0 : index
    %c0_2 = arith.constant 0 : index
    %1 = vector.load %arg2[%c0_1, %c0_2] : memref<128x128xbf16, #tpu.memory_space<vmem>>, vector<128x128xbf16>
    %cst = arith.constant dense<0.000000e+00> : vector<64x128xf32>
    %2 = tpu.matmul %0, %1, %cst {dimension_numbers = #tpu.dot_dimension_numbers<[1], [0], [0], [1], [0, 0, 1, 1], [], []>} : vector<64x128xbf16>, vector<128x128xbf16>, vector<64x128xf32> -> vector<64x128xf32>
    %3 = arith.truncf %2 : vector<64x128xf32> to vector<64x128xbf16>
    %c0_3 = arith.constant 0 : index
    %c0_4 = arith.constant 0 : index
    %4 = vector.load %arg5[%c0_3, %c0_4] : memref<64x128xbf16, #tpu.memory_space<vmem>>, vector<64x128xbf16>
    tpu.vector_store %arg5[%c0_3, %c0_4], %3 {strides = array<i32>} : memref<64x128xbf16, #tpu.memory_space<vmem>>, vector<64x128xbf16>,
    %c0_5 = arith.constant 0 : index
    %c0_6 = arith.constant 0 : index
    %5 = vector.load %arg3[%c0_5, %c0_6] : memref<128x128xbf16, #tpu.memory_space<vmem>>, vector<128x128xbf16>
    %cst_7 = arith.constant dense<0.000000e+00> : vector<64x128xf32>
    %6 = tpu.matmul %0, %5, %cst_7 {dimension_numbers = #tpu.dot_dimension_numbers<[1], [0], [0], [1], [0, 0, 1, 1], [], []>} : vector<64x128xbf16>, vector<128x128xbf16>, vector<64x128xf32> -> vector<64x128xf32>
    %c0_8 = arith.constant 0 : index
    %c0_9 = arith.constant 0 : index
    %7 = vector.load %arg4[%c0_8, %c0_9] : memref<1x128xf32, #tpu.memory_space<vmem>>, vector<1x128xf32>
    %8 = vector.broadcast %7 : vector<1x128xf32> to vector<64x128xf32>
    %9 = arith.addf %6, %8 : vector<64x128xf32>
    %c0_10 = arith.constant 0 : index
    %c0_11 = arith.constant 0 : index
    %10 = vector.load %arg6[%c0_10, %c0_11] : memref<64x128xf32, #tpu.memory_space<vmem>>, vector<64x128xf32>
    tpu.vector_store %arg6[%c0_10, %c0_11], %9 {strides = array<i32>} : memref<64x128xf32, #tpu.memory_space<vmem>>, vector<64x128xf32>,
    return
  }
  func.func @transform_0(%arg0: i32) -> (i32, i32) {
    %c0_i32 = arith.constant 0 : i32
    %c0_i32_0 = arith.constant 0 : i32
    return %arg0, %c0_i32 : i32, i32
  }
  func.func @transform_1(%arg0: i32) -> (i32, i32) {
    %c0_i32 = arith.constant 0 : i32
    %c0_i32_0 = arith.constant 0 : i32
    %c0_i32_1 = arith.constant 0 : i32
    return %c0_i32, %c0_i32_0 : i32, i32
  }
  func.func @transform_2(%arg0: i32) -> (i32, i32) {
    %c0_i32 = arith.constant 0 : i32
    %c0_i32_0 = arith.constant 0 : i32
    %c0_i32_1 = arith.constant 0 : i32
    return %c0_i32, %c0_i32_0 : i32, i32
  }
  func.func @transform_3(%arg0: i32) -> (i32, i32) {
    %c0_i32 = arith.constant 0 : i32
    %c0_i32_0 = arith.constant 0 : i32
    %c0_i32_1 = arith.constant 0 : i32
    return %c0_i32, %c0_i32_0 : i32, i32
  }
  func.func @transform_4(%arg0: i32) -> (i32, i32) {
    %c0_i32 = arith.constant 0 : i32
    %c0_i32_0 = arith.constant 0 : i32
    return %arg0, %c0_i32 : i32, i32
  }
  func.func @transform_5(%arg0: i32) -> (i32, i32) {
    %c0_i32 = arith.constant 0 : i32
    %c0_i32_0 = arith.constant 0 : i32
    return %arg0, %c0_i32 : i32, i32
  }
}

module attributes {stable_mosaic.version = 11 : i64} {
  func.func @_sage_agg_kernel(%arg0: i32, %arg1: i32, %arg2: memref<2x1xi32, #tpu.memory_space<smem>>, %arg3: memref<2xi32, #tpu.memory_space<smem>>, %arg4: memref<64x128xbf16, #tpu.memory_space<vmem>>, %arg5: memref<128x128xbf16, #tpu.memory_space<vmem>>, %arg6: memref<64x128xf32, #tpu.memory_space<vmem>>, %arg7: memref<64x1xf32, #tpu.memory_space<vmem>>, %arg8: memref<64x128xf32, #tpu.memory_space<vmem>>, %arg9: memref<64x128xf32, #tpu.memory_space<vmem>>) attributes {dimension_semantics = [#tpu.dimension_semantics<parallel>, #tpu.dimension_semantics<arbitrary>], iteration_bounds = array<i64: 2, 1>, scalar_prefetch = 2 : i64, scratch_operands = 1 : i64, tpu.core_type = #tpu.core_type<tc>, window_params = [{transform_indices = @transform_0, window_bounds = array<i64: 64, 128>}, {transform_indices = @transform_1, window_bounds = array<i64: 128, 128>}, {transform_indices = @transform_2, window_bounds = array<i64: 64, 128>}, {transform_indices = @transform_3, window_bounds = array<i64: 64, 1>}, {transform_indices = @transform_4, window_bounds = array<i64: 64, 128>}]} {
    %c0_i32 = arith.constant 0 : i32
    %0 = arith.cmpi eq, %arg1, %c0_i32 : i32
    %1 = arith.extui %0 : i1 to i32
    %c0_i32_0 = arith.constant 0 : i32
    %2 = arith.cmpi ne, %1, %c0_i32_0 : i32
    scf.if %2 {
      %cst = arith.constant 0.000000e+00 : f32
      %11 = vector.broadcast %cst : f32 to vector<64x128xf32>
      %c0 = arith.constant 0 : index
      %c0_4 = arith.constant 0 : index
      %12 = vector.load %arg9[%c0, %c0_4] : memref<64x128xf32, #tpu.memory_space<vmem>>, vector<64x128xf32>
      tpu.vector_store %arg9[%c0, %c0_4], %11 {strides = array<i32>} : memref<64x128xf32, #tpu.memory_space<vmem>>, vector<64x128xf32>,
    } else {
    }
    %3 = arith.index_cast %arg0 : i32 to index
    %4 = memref.load %arg3[%3] : memref<2xi32, #tpu.memory_space<smem>>
    %5 = arith.cmpi slt, %arg1, %4 : i32
    %6 = arith.extui %5 : i1 to i32
    %c0_i32_1 = arith.constant 0 : i32
    %7 = arith.cmpi ne, %6, %c0_i32_1 : i32
    scf.if %7 {
      %c0 = arith.constant 0 : index
      %c0_4 = arith.constant 0 : index
      %11 = vector.load %arg9[%c0, %c0_4] : memref<64x128xf32, #tpu.memory_space<vmem>>, vector<64x128xf32>
      %c0_5 = arith.constant 0 : index
      %c0_6 = arith.constant 0 : index
      %12 = vector.load %arg4[%c0_5, %c0_6] : memref<64x128xbf16, #tpu.memory_space<vmem>>, vector<64x128xbf16>
      %c0_7 = arith.constant 0 : index
      %c0_8 = arith.constant 0 : index
      %13 = vector.load %arg5[%c0_7, %c0_8] : memref<128x128xbf16, #tpu.memory_space<vmem>>, vector<128x128xbf16>
      %cst = arith.constant dense<0.000000e+00> : vector<64x128xf32>
      %14 = tpu.matmul %12, %13, %cst {dimension_numbers = #tpu.dot_dimension_numbers<[1], [0], [0], [1], [0, 0, 1, 1], [], []>} : vector<64x128xbf16>, vector<128x128xbf16>, vector<64x128xf32> -> vector<64x128xf32>
      %15 = arith.addf %11, %14 : vector<64x128xf32>
      %c0_9 = arith.constant 0 : index
      %c0_10 = arith.constant 0 : index
      %16 = vector.load %arg9[%c0_9, %c0_10] : memref<64x128xf32, #tpu.memory_space<vmem>>, vector<64x128xf32>
      tpu.vector_store %arg9[%c0_9, %c0_10], %15 {strides = array<i32>} : memref<64x128xf32, #tpu.memory_space<vmem>>, vector<64x128xf32>,
    } else {
    }
    %c0_i32_2 = arith.constant 0 : i32
    %8 = arith.cmpi eq, %arg1, %c0_i32_2 : i32
    %9 = arith.extui %8 : i1 to i32
    %c0_i32_3 = arith.constant 0 : i32
    %10 = arith.cmpi ne, %9, %c0_i32_3 : i32
    scf.if %10 {
      %c0 = arith.constant 0 : index
      %c0_4 = arith.constant 0 : index
      %11 = vector.load %arg9[%c0, %c0_4] : memref<64x128xf32, #tpu.memory_space<vmem>>, vector<64x128xf32>
      %c0_5 = arith.constant 0 : index
      %c0_6 = arith.constant 0 : index
      %12 = vector.load %arg7[%c0_5, %c0_6] : memref<64x1xf32, #tpu.memory_space<vmem>>, vector<64x1xf32>
      %13 = vector.broadcast %12 : vector<64x1xf32> to vector<64x128xf32>
      %14 = arith.mulf %11, %13 : vector<64x128xf32>
      %c0_7 = arith.constant 0 : index
      %c0_8 = arith.constant 0 : index
      %15 = vector.load %arg6[%c0_7, %c0_8] : memref<64x128xf32, #tpu.memory_space<vmem>>, vector<64x128xf32>
      %16 = arith.addf %14, %15 : vector<64x128xf32>
      %c0_9 = arith.constant 0 : index
      %c0_10 = arith.constant 0 : index
      %17 = vector.load %arg8[%c0_9, %c0_10] : memref<64x128xf32, #tpu.memory_space<vmem>>, vector<64x128xf32>
      tpu.vector_store %arg8[%c0_9, %c0_10], %16 {strides = array<i32>} : memref<64x128xf32, #tpu.memory_space<vmem>>, vector<64x128xf32>,
    } else {
    }
    return
  }
  func.func @transform_0(%arg0: i32, %arg1: i32, %arg2: memref<2x1xi32, #tpu.memory_space<smem>>, %arg3: memref<2xi32, #tpu.memory_space<smem>>) -> (i32, i32) {
    %0 = arith.index_cast %arg0 : i32 to index
    %1 = arith.index_cast %arg1 : i32 to index
    %2 = memref.load %arg2[%0, %1] : memref<2x1xi32, #tpu.memory_space<smem>>
    %c0_i32 = arith.constant 0 : i32
    return %arg0, %2 : i32, i32
  }
  func.func @transform_1(%arg0: i32, %arg1: i32, %arg2: memref<2x1xi32, #tpu.memory_space<smem>>, %arg3: memref<2xi32, #tpu.memory_space<smem>>) -> (i32, i32) {
    %0 = arith.index_cast %arg0 : i32 to index
    %1 = arith.index_cast %arg1 : i32 to index
    %2 = memref.load %arg2[%0, %1] : memref<2x1xi32, #tpu.memory_space<smem>>
    %c0_i32 = arith.constant 0 : i32
    %c0_i32_0 = arith.constant 0 : i32
    return %2, %c0_i32 : i32, i32
  }
  func.func @transform_2(%arg0: i32, %arg1: i32, %arg2: memref<2x1xi32, #tpu.memory_space<smem>>, %arg3: memref<2xi32, #tpu.memory_space<smem>>) -> (i32, i32) {
    %c0_i32 = arith.constant 0 : i32
    %c0_i32_0 = arith.constant 0 : i32
    return %arg0, %c0_i32 : i32, i32
  }
  func.func @transform_3(%arg0: i32, %arg1: i32, %arg2: memref<2x1xi32, #tpu.memory_space<smem>>, %arg3: memref<2xi32, #tpu.memory_space<smem>>) -> (i32, i32) {
    %c0_i32 = arith.constant 0 : i32
    %c0_i32_0 = arith.constant 0 : i32
    return %arg0, %c0_i32 : i32, i32
  }
  func.func @transform_4(%arg0: i32, %arg1: i32, %arg2: memref<2x1xi32, #tpu.memory_space<smem>>, %arg3: memref<2xi32, #tpu.memory_space<smem>>) -> (i32, i32) {
    %c0_i32 = arith.constant 0 : i32
    %c0_i32_0 = arith.constant 0 : i32
    return %arg0, %c0_i32 : i32, i32
  }
}

</mosaic_0001>

<llo_original>
// kernel: graphsage_forward.6
$region0: #{graphsage_forward.6}
  #allocation0 [shape = 'u32[]', space=smem, size = 0x4, offset = 0x4, fixed_abs, tag = 'smem constant byte address 0x4 - core index']
  #allocation1 [shape = 'u32[144,128]{1,0:T(1,128)}', space=vmem, size = 0x12000, scoped, tag = 'internal scratch']
  %s0 = inlined_call_operand.vmem [shape: bf16[128,128], index: 0, kind: input, shape index: {}]
  %s1 = inlined_call_operand.vmem [shape: bf16[128,128], index: 1, kind: input, shape index: {}]
  %s2 = inlined_call_operand.vmem [shape: bf16[128,128], index: 2, kind: input, shape index: {}]
  %s3 = inlined_call_operand.vmem [shape: f32[1,128], index: 3, kind: input, shape index: {}]
  %s4 = inlined_call_operand.vmem [shape: bf16[128,128], index: 4, kind: output, shape index: {0}]
  %s5 = inlined_call_operand.vmem [shape: f32[128,128], index: 5, kind: output, shape index: {1}]
  %6 = xla_tuple %s4, %s5
  %s7 = sld [smem:[#allocation0]]
  $region57: #{graphsage_forward.6} parent=0
    _
  %s9 = ssub.s32 1, %s7
  %s10 = scalar_select 0, %s9, %s7
  loop: start=0, step=1, limit=4
  $region2: #{graphsage_forward.6} parent=0 // loop_pre_header
    _
  $region3: #{graphsage_forward.6} parent=0 // loop_header
    %s12 = sphi 0, %s16
    %p13 = scmp.ge.s32.totalorder %s12, 4
    %s22 = sphi 0, %s24
    %s25 = sphi 0, %s22
    %s26 = sphi 0, %s25
    %s42 = sphi 0, %s26
    %s46 = sphi 0, %s46
    %s48 = sphi 0, %s46
    %s49 = sphi 0, %s48
    %s63 = sphi 0, %s49
    %s67 = sphi 0, %s67
    %s69 = sphi 0, %s67
    %s70 = sphi 0, %s69
    %s84 = sphi 0, %s70
    %s88 = sphi 0, %s88
    %s90 = sphi 0, %s88
    %s91 = sphi 0, %s90
    %s105 = sphi 0, %s91
    %s111 = sphi 0, %s113
    %s114 = sphi 0, %s111
    %s115 = sphi 0, %s114
    %s131 = sphi 0, %s115
    %s137 = sphi 0, %s139
    %s140 = sphi 0, %s137
    %s141 = sphi 0, %s140
    %s157 = sphi 0, %s141
  $region4: #{graphsage_forward.6} parent=0 // loop_header_branch
    %15 = sbr.rel (%p13) target = $region8
  $region5: #{graphsage_forward.6} parent=0 // loop_body
    %s17 = ssub.s32 %s12, 1
    %s18 = ssub.s32 %s12, 2
    %s19 = sadd.s32 %s12, 1
    %s20 = ssub.s32 %s12, %s19
    %p21 = scmp.eq.s32.totalorder %s20, 0
    %s23 = sadd.s32 %s22, 1
    %s24 = scalar_select %p21, %s22, %s23
    %p27 = pneg %p21
    %p28 = scmp.eq.s32.totalorder %s12, 1
    %p29 = por %p27, %p28
    %p30 = scmp.ne.s32.totalorder %s22, %s25
    %p31 = scmp.eq.s32.totalorder %s12, 0
    %p32 = por %p30, %p31
    %p33 = scmp.ne.s32.totalorder %s22, %s25
    %p34 = scmp.eq.s32.totalorder %s17, 1
    %p35 = por %p33, %p34
    %p36 = scmp.ne.s32.totalorder %s25, %s26
    %p37 = scmp.eq.s32.totalorder %s17, 0
    %p38 = por %p36, %p37
    %p39 = scmp.ne.s32.totalorder %s25, %s26
    %p40 = scmp.eq.s32.totalorder %s18, 1
    %p41 = por %p39, %p40
    %p43 = scmp.ne.s32.totalorder %s26, %s42
    %p44 = scmp.eq.s32.totalorder %s18, 0
    %p45 = por %p43, %p44
    %s47 = sadd.s32 %s46, 1
    %p50 = scmp.eq.s32.totalorder %s12, 1
    %p51 = scmp.ne.s32.totalorder %s46, %s48
    %p52 = scmp.eq.s32.totalorder %s12, 0
    %p53 = por %p51, %p52
    %p54 = scmp.ne.s32.totalorder %s46, %s48
    %p55 = scmp.eq.s32.totalorder %s17, 1
    %p56 = por %p54, %p55
    %p57 = scmp.ne.s32.totalorder %s48, %s49
    %p58 = scmp.eq.s32.totalorder %s17, 0
    %p59 = por %p57, %p58
    %p60 = scmp.ne.s32.totalorder %s48, %s49
    %p61 = scmp.eq.s32.totalorder %s18, 1
    %p62 = por %p60, %p61
    %p64 = scmp.ne.s32.totalorder %s49, %s63
    %p65 = scmp.eq.s32.totalorder %s18, 0
    %p66 = por %p64, %p65
    %s68 = sadd.s32 %s67, 1
    %p71 = scmp.eq.s32.totalorder %s12, 1
    %p72 = scmp.ne.s32.totalorder %s67, %s69
    %p73 = scmp.eq.s32.totalorder %s12, 0
    %p74 = por %p72, %p73
    %p75 = scmp.ne.s32.totalorder %s67, %s69
    %p76 = scmp.eq.s32.totalorder %s17, 1
    %p77 = por %p75, %p76
    %p78 = scmp.ne.s32.totalorder %s69, %s70
    %p79 = scmp.eq.s32.totalorder %s17, 0
    %p80 = por %p78, %p79
    %p81 = scmp.ne.s32.totalorder %s69, %s70
    %p82 = scmp.eq.s32.totalorder %s18, 1
    %p83 = por %p81, %p82
    %p85 = scmp.ne.s32.totalorder %s70, %s84
    %p86 = scmp.eq.s32.totalorder %s18, 0
    %p87 = por %p85, %p86
    %s89 = sadd.s32 %s88, 1
    %p92 = scmp.eq.s32.totalorder %s12, 1
    %p93 = scmp.ne.s32.totalorder %s88, %s90
    %p94 = scmp.eq.s32.totalorder %s12, 0
    %p95 = por %p93, %p94
    %p96 = scmp.ne.s32.totalorder %s88, %s90
    %p97 = scmp.eq.s32.totalorder %s17, 1
    %p98 = por %p96, %p97
    %p99 = scmp.ne.s32.totalorder %s90, %s91
    %p100 = scmp.eq.s32.totalorder %s17, 0
    %p101 = por %p99, %p100
    %p102 = scmp.ne.s32.totalorder %s90, %s91
    %p103 = scmp.eq.s32.totalorder %s18, 1
    %p104 = por %p102, %p103
    %p106 = scmp.ne.s32.totalorder %s91, %s105
    %p107 = scmp.eq.s32.totalorder %s18, 0
    %p108 = por %p106, %p107
    %s109 = ssub.s32 %s12, %s19
    %p110 = scmp.eq.s32.totalorder %s109, 0
    %s112 = sadd.s32 %s111, 1
    %s113 = scalar_select %p110, %s111, %s112
    %p116 = pneg %p110
    %p117 = scmp.eq.s32.totalorder %s12, 1
    %p118 = por %p116, %p117
    %p119 = scmp.ne.s32.totalorder %s111, %s114
    %p120 = scmp.eq.s32.totalorder %s12, 0
    %p121 = por %p119, %p120
    %p122 = scmp.ne.s32.totalorder %s111, %s114
    %p123 = scmp.eq.s32.totalorder %s17, 1
    %p124 = por %p122, %p123
    %p125 = scmp.ne.s32.totalorder %s114, %s115
    %p126 = scmp.eq.s32.totalorder %s17, 0
    %p127 = por %p125, %p126
    %p128 = scmp.ne.s32.totalorder %s114, %s115
    %p129 = scmp.eq.s32.totalorder %s18, 1
    %p130 = por %p128, %p129
    %p132 = scmp.ne.s32.totalorder %s115, %s131
    %p133 = scmp.eq.s32.totalorder %s18, 0
    %p134 = por %p132, %p133
    %s135 = ssub.s32 %s12, %s19
    %p136 = scmp.eq.s32.totalorder %s135, 0
    %s138 = sadd.s32 %s137, 1
    %s139 = scalar_select %p136, %s137, %s138
    %p142 = pneg %p136
    %p143 = scmp.eq.s32.totalorder %s12, 1
    %p144 = por %p142, %p143
    %p145 = scmp.ne.s32.totalorder %s137, %s140
    %p146 = scmp.eq.s32.totalorder %s12, 0
    %p147 = por %p145, %p146
    %p148 = scmp.ne.s32.totalorder %s137, %s140
    %p149 = scmp.eq.s32.totalorder %s17, 1
    %p150 = por %p148, %p149
    %p151 = scmp.ne.s32.totalorder %s140, %s141
    %p152 = scmp.eq.s32.totalorder %s17, 0
    %p153 = por %p151, %p152
    %p154 = scmp.ne.s32.totalorder %s140, %s141
    %p155 = scmp.eq.s32.totalorder %s18, 1
    %p156 = por %p154, %p155
    %p158 = scmp.ne.s32.totalorder %s141, %s157
    %p159 = scmp.eq.s32.totalorder %s18, 0
    %p160 = por %p158, %p159
    %p161 = scmp.le.s32.totalorder 1, %s12
    %p162 = scmp.lt.s32.totalorder %s12, 3
    %p163 = pnand %p161, %p162
    %p164 = pneg %p163
    // Predicated region
    $region9: #{graphsage_forward.6} parent=5 // pred_check
      _
    $region10: #{graphsage_forward.6} parent=5 // pred_check_branch
      %166 = sbr.rel (%p163) target = $region12
    $region11: #{graphsage_forward.6} parent=5 // pred_region
      %s167 = ssub.s32 %s12, 1
      // Predicated region
      $region13: #{graphsage_forward.6} parent=11 // pred_check
        %p168 = pneg %p59
      $region14: #{graphsage_forward.6} parent=11 // pred_check_branch
        %170 = sbr.rel (%p168) target = $region16
      $region15: #{graphsage_forward.6} parent=11 // pred_region
        _
      $region16: #{graphsage_forward.6} parent=11 // pred_fallthru
        _
      // Predicated region
      $region17: #{graphsage_forward.6} parent=11 // pred_check
        %p171 = pneg %p80
      $region18: #{graphsage_forward.6} parent=11 // pred_check_branch
        %173 = sbr.rel (%p171) target = $region20
      $region19: #{graphsage_forward.6} parent=11 // pred_region
        _
      $region20: #{graphsage_forward.6} parent=11 // pred_fallthru
        _
      // Predicated region
      $region21: #{graphsage_forward.6} parent=11 // pred_check
        %p174 = pneg %p101
      $region22: #{graphsage_forward.6} parent=11 // pred_check_branch
        %176 = sbr.rel (%p174) target = $region24
      $region23: #{graphsage_forward.6} parent=11 // pred_region
        _
      $region24: #{graphsage_forward.6} parent=11 // pred_fallthru
        _
    $region12: #{graphsage_forward.6} parent=5 // pred_fallthru
      _
    %p177 = scmp.lt.s32.totalorder %s12, 2
    // Predicated region
    $region25: #{graphsage_forward.6} parent=5 // pred_check
      %p178 = pneg %p177
    $region26: #{graphsage_forward.6} parent=5 // pred_check_branch
      %180 = sbr.rel (%p178) target = $region28
    $region27: #{graphsage_forward.6} parent=5 // pred_region
      // Predicated region
      $region29: #{graphsage_forward.6} parent=27 // pred_check
        %p181 = pneg %p32
      $region30: #{graphsage_forward.6} parent=27 // pred_check_branch
        %183 = sbr.rel (%p181) target = $region32
      $region31: #{graphsage_forward.6} parent=27 // pred_region
        %s184 = smul.u32 8, %s12
        %p185 = scmp.lt.s32.totalorder %s184, 15
        %s186 = scalar_select %p185, %s184, 15
        %s187 = smul.addr %s186, 4
        %s188 = scalar_lea.vmem %s0, %s187
        %s189 = smul.u32 8, %s12
      $region32: #{graphsage_forward.6} parent=27 // pred_fallthru
        _
    $region28: #{graphsage_forward.6} parent=5 // pred_fallthru
      _
    %p190 = scmp.le.s32.totalorder 1, %s12
    %p191 = scmp.lt.s32.totalorder %s12, 3
    %p192 = pnand %p190, %p191
    %p193 = pneg %p192
    // Predicated region
    $region33: #{graphsage_forward.6} parent=5 // pred_check
      _
    $region34: #{graphsage_forward.6} parent=5 // pred_check_branch
      %195 = sbr.rel (%p192) target = $region36
    $region35: #{graphsage_forward.6} parent=5 // pred_region
      %s196 = ssub.s32 %s12, 1
      %s197 = smul.u32 8, %s17
      %p198 = scmp.lt.s32.totalorder %s197, 15
      %s199 = scalar_select %p198, %s197, 15
      %s200 = smul.addr %s199, 4
      %s201 = scalar_lea.vmem %s0, %s200
      %p202 = pneg %p38
      %p203 = pneg %p35
      %p204 = pneg %p59
      %p205 = pneg %p56
      %p206 = pneg %p80
      %p207 = pneg %p77
      %p208 = pneg %p101
      %p209 = pneg %p98
      %p210 = pneg %p127
      %p211 = pneg %p124
      %s212 = smul.u32 8, %s17
      %p213 = scmp.lt.s32.totalorder %s212, 15
      %s214 = scalar_select %p213, %s212, 15
      %s215 = smul.addr %s214, 4
      %s216 = scalar_lea.vmem %s4, %s215
      %p217 = pneg %p153
      %p218 = pneg %p150
      %s219 = smul.u32 8, %s17
      %p220 = scmp.lt.s32.totalorder %s219, 15
      %s221 = scalar_select %p220, %s219, 15
      %s222 = smul.addr %s221, 8
      %s223 = scalar_lea.vmem %s5, %s222
      %s224 = smul.u32 8, %s17
      %p225 = scmp.lt.s32.totalorder %s224, 15
      %s226 = scalar_select %p225, %s224, 15
      %s227 = smul.addr %s226, 4
      %s228 = scalar_lea.vmem %s0, %s227
      %s229 = smul.u32 8, %s17
      %s230 = smul.u32 8, %s17
      %p231 = scmp.lt.s32.totalorder %s230, 15
      %s232 = scalar_select %p231, %s230, 15
      %s233 = smul.addr %s232, 4
      %s234 = scalar_lea.vmem %s4, %s233
      %s235 = smul.u32 8, %s17
      %s236 = smul.u32 8, %s17
      %p237 = scmp.lt.s32.totalorder %s236, 15
      %s238 = scalar_select %p237, %s236, 15
      %s239 = smul.addr %s238, 8
      %s240 = scalar_lea.vmem %s5, %s239
      %s241 = smul.u32 8, %s17
      %v243 = vld [vmem:[%s228] sm:$0xf]
      %v244 = vld [vmem:[%s228 + $0x4] sm:$0xf]
      %v245 = vld [vmem:[%s228 + $0x8] sm:$0xf]
      %v246 = vld [vmem:[%s228 + $0xc] sm:$0xf]
      %v247 = vld [vmem:[%s228 + $0x10] sm:$0xf]
      %v248 = vld [vmem:[%s228 + $0x14] sm:$0xf]
      %v249 = vld [vmem:[%s228 + $0x18] sm:$0xf]
      %v250 = vld [vmem:[%s228 + $0x1c] sm:$0xf]
      %v251 = vld [vmem:[%s1] sm:$0xf]
      %v252 = vld [vmem:[%s1 + $0x4] sm:$0xf]
      %v253 = vld [vmem:[%s1 + $0x8] sm:$0xf]
      %v254 = vld [vmem:[%s1 + $0xc] sm:$0xf]
      %v255 = vld [vmem:[%s1 + $0x10] sm:$0xf]
      %v256 = vld [vmem:[%s1 + $0x14] sm:$0xf]
      %v257 = vld [vmem:[%s1 + $0x18] sm:$0xf]
      %v258 = vld [vmem:[%s1 + $0x1c] sm:$0xf]
      %v259 = vld [vmem:[%s1 + $0x20] sm:$0xf]
      %v260 = vld [vmem:[%s1 + $0x24] sm:$0xf]
      %v261 = vld [vmem:[%s1 + $0x28] sm:$0xf]
      %v262 = vld [vmem:[%s1 + $0x2c] sm:$0xf]
      %v263 = vld [vmem:[%s1 + $0x30] sm:$0xf]
      %v264 = vld [vmem:[%s1 + $0x34] sm:$0xf]
      %v265 = vld [vmem:[%s1 + $0x38] sm:$0xf]
      %v266 = vld [vmem:[%s1 + $0x3c] sm:$0xf]
      %v275 = vunpack.c.l.b16 %v243
      %v276 = vunpack.c.l.b16 %v244
      %v277 = vunpack.c.l.b16 %v245
      %v278 = vunpack.c.l.b16 %v246
      %v279 = vunpack.c.l.b16 %v247
      %v280 = vunpack.c.l.b16 %v248
      %v281 = vunpack.c.l.b16 %v249
      %v282 = vunpack.c.l.b16 %v250
      %v283 = vpack.c.b16 %v276, %v275
      %v284 = vpack.c.b16 %v278, %v277
      %v285 = vpack.c.b16 %v280, %v279
      %v286 = vpack.c.b16 %v282, %v281
      %v307 = vunpack.c.l.b16 %v251
      %v308 = vunpack.c.l.b16 %v252
      %v309 = vunpack.c.l.b16 %v253
      %v310 = vunpack.c.l.b16 %v254
      %v311 = vunpack.c.l.b16 %v255
      %v312 = vunpack.c.l.b16 %v256
      %v313 = vunpack.c.l.b16 %v257
      %v314 = vunpack.c.l.b16 %v258
      %v315 = vunpack.c.l.b16 %v259
      %v316 = vunpack.c.l.b16 %v260
      %v317 = vunpack.c.l.b16 %v261
      %v318 = vunpack.c.l.b16 %v262
      %v319 = vunpack.c.l.b16 %v263
      %v320 = vunpack.c.l.b16 %v264
      %v321 = vunpack.c.l.b16 %v265
      %v322 = vunpack.c.l.b16 %v266
      %v323 = vpack.c.b16 %v308, %v307
      %v324 = vpack.c.b16 %v310, %v309
      %v325 = vpack.c.b16 %v312, %v311
      %v326 = vpack.c.b16 %v314, %v313
      %v327 = vpack.c.b16 %v316, %v315
      %v328 = vpack.c.b16 %v318, %v317
      %v329 = vpack.c.b16 %v320, %v319
      %v330 = vpack.c.b16 %v322, %v321
      %339 = vmatprep.subr.bf16.mxu0 0
      %340 = vmatpush1.bf16.msra.mxu0 %v323
      %341 = vmatprep.subr.bf16.mxu0 0
      %342 = vmatpush1.bf16.msra.mxu0 %v324
      %343 = vmatprep.subr.bf16.mxu0 0
      %344 = vmatpush1.bf16.msra.mxu0 %v325
      %345 = vmatprep.subr.bf16.mxu0 0
      %346 = vmatpush1.bf16.msra.mxu0 %v326
      %347 = vmatprep.subr.bf16.mxu0 0
      %348 = vmatpush1.bf16.msra.mxu0 %v327
      %349 = vmatprep.subr.bf16.mxu0 0
      %350 = vmatpush1.bf16.msra.mxu0 %v328
      %351 = vmatprep.subr.bf16.mxu0 0
      %352 = vmatpush1.bf16.msra.mxu0 %v329
      %353 = vmatprep.subr.bf16.mxu0 0
      %354 = vmatpush1.bf16.msra.mxu0 %v330
      %355 = vmatprep.subr.bf16.mxu0 0
      %356 = vmatpush1.bf16.msra.mxu0 0
      %357 = vmatprep.subr.bf16.mxu0 0
      %358 = vmatpush1.bf16.msra.mxu0 0
      %359 = vmatprep.subr.bf16.mxu0 0
      %360 = vmatpush1.bf16.msra.mxu0 0
      %361 = vmatprep.subr.bf16.mxu0 0
      %362 = vmatpush1.bf16.msra.mxu0 0
      %363 = vmatprep.subr.bf16.mxu0 0
      %364 = vmatpush1.bf16.msra.mxu0 0
      %365 = vmatprep.subr.bf16.mxu0 0
      %366 = vmatpush1.bf16.msra.mxu0 0
      %367 = vmatprep.subr.bf16.mxu0 0
      %368 = vmatpush1.bf16.msra.mxu0 0
      %369 = vmatprep.subr.bf16.mxu0 0
      %370 = vmatpush1.bf16.msra.mxu0 0
      %371 = vmatprep.mubr.bf16.mxu0 0
      %372 = vmatmul.mubr.bf16.gmra.mrb[0].mxu0 %v283
      %v373 = vpop.f32.mrb[0].mxu0
      %v374 = vadd.f32 0.0, %v373
      %v375 = vpop.f32.mrb[0].mxu0
      %v376 = vpop.f32.mrb[0].mxu0
      %v377 = vadd.f32 0.0, %v376
      %v378 = vpop.f32.mrb[0].mxu0
      %379 = vmatprep.mubr.bf16.mxu0 0
      %380 = vmatmul.mubr.bf16.gmra.mrb[0].mxu0 %v284
      %v381 = vpop.f32.mrb[0].mxu0
      %v382 = vadd.f32 0.0, %v381
      %v383 = vpop.f32.mrb[0].mxu0
      %v384 = vpop.f32.mrb[0].mxu0
      %v385 = vadd.f32 0.0, %v384
      %v386 = vpop.f32.mrb[0].mxu0
      %387 = vmatprep.mubr.bf16.mxu0 0
      %388 = vmatmul.mubr.bf16.gmra.mrb[0].mxu0 %v285
      %v389 = vpop.f32.mrb[0].mxu0
      %v390 = vadd.f32 0.0, %v389
      %v391 = vpop.f32.mrb[0].mxu0
      %v392 = vpop.f32.mrb[0].mxu0
      %v393 = vadd.f32 0.0, %v392
      %v394 = vpop.f32.mrb[0].mxu0
      %395 = vmatprep.mubr.bf16.mxu0 0
      %396 = vmatmul.mubr.bf16.gmra.mrb[0].mxu0 %v286
      %v397 = vpop.f32.mrb[0].mxu0
      %v398 = vadd.f32 0.0, %v397
      %v399 = vpop.f32.mrb[0].mxu0
      %v400 = vpop.f32.mrb[0].mxu0
      %v401 = vadd.f32 0.0, %v400
      %v402 = vpop.f32.mrb[0].mxu0
      %403 = vdwg.mxu0
      %v404 = vpack.c.bf16 %v377, %v374
      %v405 = vpack.c.bf16 %v385, %v382
      %v406 = vpack.c.bf16 %v393, %v390
      %v407 = vpack.c.bf16 %v401, %v398
      %v412 = vunpack.c.l.b16 %v404
      %v413 = vunpack.c.h.b16 %v404
      %v414 = vunpack.c.l.b16 %v405
      %v415 = vunpack.c.h.b16 %v405
      %v416 = vunpack.c.l.b16 %v406
      %v417 = vunpack.c.h.b16 %v406
      %v418 = vunpack.c.l.b16 %v407
      %v419 = vunpack.c.h.b16 %v407
      %v420 = vpack.c.b16 %v412, %v412
      %v421 = vpack.c.b16 %v413, %v413
      %v422 = vpack.c.b16 %v414, %v414
      %v423 = vpack.c.b16 %v415, %v415
      %v424 = vpack.c.b16 %v416, %v416
      %v425 = vpack.c.b16 %v417, %v417
      %v426 = vpack.c.b16 %v418, %v418
      %v427 = vpack.c.b16 %v419, %v419
      %436 = vst [vmem:[%s234] sm:$0xf] %v420
      %437 = vst [vmem:[%s234 + $0x4] sm:$0xf] %v421
      %438 = vst [vmem:[%s234 + $0x8] sm:$0xf] %v422
      %439 = vst [vmem:[%s234 + $0xc] sm:$0xf] %v423
      %440 = vst [vmem:[%s234 + $0x10] sm:$0xf] %v424
      %441 = vst [vmem:[%s234 + $0x14] sm:$0xf] %v425
      %442 = vst [vmem:[%s234 + $0x18] sm:$0xf] %v426
      %443 = vst [vmem:[%s234 + $0x1c] sm:$0xf] %v427
      %v444 = vld [vmem:[%s2] sm:$0xf]
      %v445 = vld [vmem:[%s2 + $0x4] sm:$0xf]
      %v446 = vld [vmem:[%s2 + $0x8] sm:$0xf]
      %v447 = vld [vmem:[%s2 + $0xc] sm:$0xf]
      %v448 = vld [vmem:[%s2 + $0x10] sm:$0xf]
      %v449 = vld [vmem:[%s2 + $0x14] sm:$0xf]
      %v450 = vld [vmem:[%s2 + $0x18] sm:$0xf]
      %v451 = vld [vmem:[%s2 + $0x1c] sm:$0xf]
      %v452 = vld [vmem:[%s2 + $0x20] sm:$0xf]
      %v453 = vld [vmem:[%s2 + $0x24] sm:$0xf]
      %v454 = vld [vmem:[%s2 + $0x28] sm:$0xf]
      %v455 = vld [vmem:[%s2 + $0x2c] sm:$0xf]
      %v456 = vld [vmem:[%s2 + $0x30] sm:$0xf]
      %v457 = vld [vmem:[%s2 + $0x34] sm:$0xf]
      %v458 = vld [vmem:[%s2 + $0x38] sm:$0xf]
      %v459 = vld [vmem:[%s2 + $0x3c] sm:$0xf]
      %v460 = vld [vmem:[%s3] sm:$0x1]
      %v462 = vlaneseq
      %v463 = vshrl.u32 %v462, 7
      %v464 = vsub.s32 0, %v463
      %v465 = vrot.slane %v460, %v464
      %v483 = vunpack.c.l.b16 %v444
      %v484 = vunpack.c.l.b16 %v445
      %v485 = vunpack.c.l.b16 %v446
      %v486 = vunpack.c.l.b16 %v447
      %v487 = vunpack.c.l.b16 %v448
      %v488 = vunpack.c.l.b16 %v449
      %v489 = vunpack.c.l.b16 %v450
      %v490 = vunpack.c.l.b16 %v451
      %v491 = vunpack.c.l.b16 %v452
      %v492 = vunpack.c.l.b16 %v453
      %v493 = vunpack.c.l.b16 %v454
      %v494 = vunpack.c.l.b16 %v455
      %v495 = vunpack.c.l.b16 %v456
      %v496 = vunpack.c.l.b16 %v457
      %v497 = vunpack.c.l.b16 %v458
      %v498 = vunpack.c.l.b16 %v459
      %v499 = vpack.c.b16 %v484, %v483
      %v500 = vpack.c.b16 %v486, %v485
      %v501 = vpack.c.b16 %v488, %v487
      %v502 = vpack.c.b16 %v490, %v489
      %v503 = vpack.c.b16 %v492, %v491
      %v504 = vpack.c.b16 %v494, %v493
      %v505 = vpack.c.b16 %v496, %v495
      %v506 = vpack.c.b16 %v498, %v497
      %515 = vmatprep.subr.bf16.mxu0 0
      %516 = vmatpush1.bf16.msra.mxu0 %v499
      %517 = vmatprep.subr.bf16.mxu0 0
      %518 = vmatpush1.bf16.msra.mxu0 %v500
      %519 = vmatprep.subr.bf16.mxu0 0
      %520 = vmatpush1.bf16.msra.mxu0 %v501
      %521 = vmatprep.subr.bf16.mxu0 0
      %522 = vmatpush1.bf16.msra.mxu0 %v502
      %523 = vmatprep.subr.bf16.mxu0 0
      %524 = vmatpush1.bf16.msra.mxu0 %v503
      %525 = vmatprep.subr.bf16.mxu0 0
      %526 = vmatpush1.bf16.msra.mxu0 %v504
      %527 = vmatprep.subr.bf16.mxu0 0
      %528 = vmatpush1.bf16.msra.mxu0 %v505
      %529 = vmatprep.subr.bf16.mxu0 0
      %530 = vmatpush1.bf16.msra.mxu0 %v506
      %531 = vmatprep.subr.bf16.mxu0 0
      %532 = vmatpush1.bf16.msra.mxu0 0
      %533 = vmatprep.subr.bf16.mxu0 0
      %534 = vmatpush1.bf16.msra.mxu0 0
      %535 = vmatprep.subr.bf16.mxu0 0
      %536 = vmatpush1.bf16.msra.mxu0 0
      %537 = vmatprep.subr.bf16.mxu0 0
      %538 = vmatpush1.bf16.msra.mxu0 0
      %539 = vmatprep.subr.bf16.mxu0 0
      %540 = vmatpush1.bf16.msra.mxu0 0
      %541 = vmatprep.subr.bf16.mxu0 0
      %542 = vmatpush1.bf16.msra.mxu0 0
      %543 = vmatprep.subr.bf16.mxu0 0
      %544 = vmatpush1.bf16.msra.mxu0 0
      %545 = vmatprep.subr.bf16.mxu0 0
      %546 = vmatpush1.bf16.msra.mxu0 0
      %547 = vmatprep.mubr.bf16.mxu0 0
      %548 = vmatmul.mubr.bf16.gmra.mrb[0].mxu0 %v283
      %v549 = vpop.f32.mrb[0].mxu0
      %v550 = vadd.f32 %v465, %v549
      %v551 = vpop.f32.mrb[0].mxu0
      %v552 = vpop.f32.mrb[0].mxu0
      %v553 = vadd.f32 %v465, %v552
      %v554 = vpop.f32.mrb[0].mxu0
      %555 = vmatprep.mubr.bf16.mxu0 0
      %556 = vmatmul.mubr.bf16.gmra.mrb[0].mxu0 %v284
      %v557 = vpop.f32.mrb[0].mxu0
      %v558 = vadd.f32 %v465, %v557
      %v559 = vpop.f32.mrb[0].mxu0
      %v560 = vpop.f32.mrb[0].mxu0
      %v561 = vadd.f32 %v465, %v560
      %v562 = vpop.f32.mrb[0].mxu0
      %563 = vmatprep.mubr.bf16.mxu0 0
      %564 = vmatmul.mubr.bf16.gmra.mrb[0].mxu0 %v285
      %v565 = vpop.f32.mrb[0].mxu0
      %v566 = vadd.f32 %v465, %v565
      %v567 = vpop.f32.mrb[0].mxu0
      %v568 = vpop.f32.mrb[0].mxu0
      %v569 = vadd.f32 %v465, %v568
      %v570 = vpop.f32.mrb[0].mxu0
      %571 = vmatprep.mubr.bf16.mxu0 0
      %572 = vmatmul.mubr.bf16.gmra.mrb[0].mxu0 %v286
      %v573 = vpop.f32.mrb[0].mxu0
      %v574 = vadd.f32 %v465, %v573
      %v575 = vpop.f32.mrb[0].mxu0
      %v576 = vpop.f32.mrb[0].mxu0
      %v577 = vadd.f32 %v465, %v576
      %v578 = vpop.f32.mrb[0].mxu0
      %579 = vdwg.mxu0
      %580 = vst [vmem:[%s240] sm:$0xff] %v550
      %581 = vst [vmem:[%s240 + $0x8] sm:$0xff] %v553
      %582 = vst [vmem:[%s240 + $0x10] sm:$0xff] %v558
      %583 = vst [vmem:[%s240 + $0x18] sm:$0xff] %v561
      %584 = vst [vmem:[%s240 + $0x20] sm:$0xff] %v566
      %585 = vst [vmem:[%s240 + $0x28] sm:$0xff] %v569
      %586 = vst [vmem:[%s240 + $0x30] sm:$0xff] %v574
      %587 = vst [vmem:[%s240 + $0x38] sm:$0xff] %v577
      %s588 = smul.u32 8, %s17
      %p589 = scmp.lt.s32.totalorder %s588, 15
      %s590 = scalar_select %p589, %s588, 15
      %s591 = smul.addr %s590, 4
      %s592 = scalar_lea.vmem %s4, %s591
      %s593 = smul.u32 8, %s17
      %p594 = scmp.lt.s32.totalorder %s593, 15
      %s595 = scalar_select %p594, %s593, 15
      %s596 = smul.addr %s595, 8
      %s597 = scalar_lea.vmem %s5, %s596
      // Predicated region
      $region37: #{graphsage_forward.6} parent=35 // pred_check
        %p598 = pneg %p124
      $region38: #{graphsage_forward.6} parent=35 // pred_check_branch
        %600 = sbr.rel (%p598) target = $region40
      $region39: #{graphsage_forward.6} parent=35 // pred_region
        %s601 = smul.u32 8, %s17
      $region40: #{graphsage_forward.6} parent=35 // pred_fallthru
        _
      // Predicated region
      $region41: #{graphsage_forward.6} parent=35 // pred_check
        %p602 = pneg %p150
      $region42: #{graphsage_forward.6} parent=35 // pred_check_branch
        %604 = sbr.rel (%p602) target = $region44
      $region43: #{graphsage_forward.6} parent=35 // pred_region
        %s605 = smul.u32 8, %s17
      $region44: #{graphsage_forward.6} parent=35 // pred_fallthru
        _
    $region36: #{graphsage_forward.6} parent=5 // pred_fallthru
      _
    %p606 = scmp.le.s32.totalorder 2, %s12
    // Predicated region
    $region45: #{graphsage_forward.6} parent=5 // pred_check
      %p607 = pneg %p606
    $region46: #{graphsage_forward.6} parent=5 // pred_check_branch
      %609 = sbr.rel (%p607) target = $region48
    $region47: #{graphsage_forward.6} parent=5 // pred_region
      %s610 = ssub.s32 %s12, 2
      // Predicated region
      $region49: #{graphsage_forward.6} parent=47 // pred_check
        %p611 = pneg %p130
      $region50: #{graphsage_forward.6} parent=47 // pred_check_branch
        %613 = sbr.rel (%p611) target = $region52
      $region51: #{graphsage_forward.6} parent=47 // pred_region
        %s614 = smul.u32 8, %s18
        %p615 = scmp.lt.s32.totalorder %s614, 15
        %s616 = scalar_select %p615, %s614, 15
        %s617 = smul.addr %s616, 4
        %s618 = scalar_lea.vmem %s4, %s617
      $region52: #{graphsage_forward.6} parent=47 // pred_fallthru
        _
      // Predicated region
      $region53: #{graphsage_forward.6} parent=47 // pred_check
        %p619 = pneg %p156
      $region54: #{graphsage_forward.6} parent=47 // pred_check_branch
        %621 = sbr.rel (%p619) target = $region56
      $region55: #{graphsage_forward.6} parent=47 // pred_region
        %s622 = smul.u32 8, %s18
        %p623 = scmp.lt.s32.totalorder %s622, 15
        %s624 = scalar_select %p623, %s622, 15
        %s625 = smul.addr %s624, 8
        %s626 = scalar_lea.vmem %s5, %s625
      $region56: #{graphsage_forward.6} parent=47 // pred_fallthru
        _
    $region48: #{graphsage_forward.6} parent=5 // pred_fallthru
      _
  $region6: #{graphsage_forward.6} parent=0 // loop_footer
    %s16 = sadd.s32 1, %s12
  $region7: #{graphsage_forward.6} parent=0 // loop_footer_branch
    %11 = sbr.rel target = $region3
  $region8: #{graphsage_forward.6} parent=0 // loop_exit
    _

// kernel: graphsage_forward.4
$region0: #{graphsage_forward.4}
  #allocation0 [shape = 'u32[]', space=smem, size = 0x4, offset = 0x4, fixed_abs, tag = 'smem constant byte address 0x4 - core index']
  #allocation1 [shape = 'u32[144,128]{1,0:T(1,128)}', space=vmem, size = 0x12000, scoped, tag = 'internal scratch']
  %s0 = inlined_call_operand.vmem [shape: bf16[128,128], index: 0, kind: input, shape index: {}]
  %s1 = inlined_call_operand.vmem [shape: bf16[128,128], index: 1, kind: input, shape index: {}]
  %s2 = inlined_call_operand.hbm [shape: bf16[128,128], index: 2, kind: input, shape index: {}]
  %s3 = inlined_call_operand.vmem [shape: f32[1,128], index: 3, kind: input, shape index: {}]
  %s4 = inlined_call_operand.vmem [shape: bf16[128,128], index: 4, kind: output, shape index: {0}]
  %s5 = inlined_call_operand.vmem [shape: f32[128,128], index: 5, kind: output, shape index: {1}]
  %6 = xla_tuple %s4, %s5
  %s7 = sld [smem:[#allocation0]]
  $region61: #{graphsage_forward.4} parent=0
    _
  %s9 = ssub.s32 1, %s7
  %s10 = scalar_select 0, %s9, %s7
  $region1: #{graphsage_forward.4} parent=0
    #allocation2 [shape = 'u8[32768]{0}', space=vmem, size = 0x8000, scoped, tag = 'input window, operand 2, single buffered']
    #allocation3 [shape = 's32[2]{0}', space=sflag, size = 0x8, scoped, tag = 'scoped memory for graphsage_forward.4']
    %11 = vsyncpa [#allocation3], 0
    loop: start=0, step=1, limit=4
    $region2: #{graphsage_forward.4} parent=1 // loop_pre_header
      _
    $region3: #{graphsage_forward.4} parent=1 // loop_header
      %s13 = sphi 0, %s17
      %p14 = scmp.ge.s32.totalorder %s13, 4
      %s23 = sphi 0, %s25
      %s26 = sphi 0, %s23
      %s27 = sphi 0, %s26
      %s43 = sphi 0, %s27
      %s47 = sphi 0, %s47
      %s49 = sphi 0, %s47
      %s50 = sphi 0, %s49
      %s64 = sphi 0, %s50
      %s68 = sphi 0, %s68
      %s70 = sphi 0, %s68
      %s71 = sphi 0, %s70
      %s85 = sphi 0, %s71
      %s89 = sphi 0, %s89
      %s91 = sphi 0, %s89
      %s92 = sphi 0, %s91
      %s106 = sphi 0, %s92
      %s112 = sphi 0, %s114
      %s115 = sphi 0, %s112
      %s116 = sphi 0, %s115
      %s132 = sphi 0, %s116
      %s138 = sphi 0, %s140
      %s141 = sphi 0, %s138
      %s142 = sphi 0, %s141
      %s158 = sphi 0, %s142
    $region4: #{graphsage_forward.4} parent=1 // loop_header_branch
      %16 = sbr.rel (%p14) target = $region8
    $region5: #{graphsage_forward.4} parent=1 // loop_body
      %s18 = ssub.s32 %s13, 1
      %s19 = ssub.s32 %s13, 2
      %s20 = sadd.s32 %s13, 1
      %s21 = ssub.s32 %s13, %s20
      %p22 = scmp.eq.s32.totalorder %s21, 0
      %s24 = sadd.s32 %s23, 1
      %s25 = scalar_select %p22, %s23, %s24
      %p28 = pneg %p22
      %p29 = scmp.eq.s32.totalorder %s13, 1
      %p30 = por %p28, %p29
      %p31 = scmp.ne.s32.totalorder %s23, %s26
      %p32 = scmp.eq.s32.totalorder %s13, 0
      %p33 = por %p31, %p32
      %p34 = scmp.ne.s32.totalorder %s23, %s26
      %p35 = scmp.eq.s32.totalorder %s18, 1
      %p36 = por %p34, %p35
      %p37 = scmp.ne.s32.totalorder %s26, %s27
      %p38 = scmp.eq.s32.totalorder %s18, 0
      %p39 = por %p37, %p38
      %p40 = scmp.ne.s32.totalorder %s26, %s27
      %p41 = scmp.eq.s32.totalorder %s19, 1
      %p42 = por %p40, %p41
      %p44 = scmp.ne.s32.totalorder %s27, %s43
      %p45 = scmp.eq.s32.totalorder %s19, 0
      %p46 = por %p44, %p45
      %s48 = sadd.s32 %s47, 1
      %p51 = scmp.eq.s32.totalorder %s13, 1
      %p52 = scmp.ne.s32.totalorder %s47, %s49
      %p53 = scmp.eq.s32.totalorder %s13, 0
      %p54 = por %p52, %p53
      %p55 = scmp.ne.s32.totalorder %s47, %s49
      %p56 = scmp.eq.s32.totalorder %s18, 1
      %p57 = por %p55, %p56
      %p58 = scmp.ne.s32.totalorder %s49, %s50
      %p59 = scmp.eq.s32.totalorder %s18, 0
      %p60 = por %p58, %p59
      %p61 = scmp.ne.s32.totalorder %s49, %s50
      %p62 = scmp.eq.s32.totalorder %s19, 1
      %p63 = por %p61, %p62
      %p65 = scmp.ne.s32.totalorder %s50, %s64
      %p66 = scmp.eq.s32.totalorder %s19, 0
      %p67 = por %p65, %p66
      %s69 = sadd.s32 %s68, 1
      %p72 = scmp.eq.s32.totalorder %s13, 1
      %p73 = scmp.ne.s32.totalorder %s68, %s70
      %p74 = scmp.eq.s32.totalorder %s13, 0
      %p75 = por %p73, %p74
      %p76 = scmp.ne.s32.totalorder %s68, %s70
      %p77 = scmp.eq.s32.totalorder %s18, 1
      %p78 = por %p76, %p77
      %p79 = scmp.ne.s32.totalorder %s70, %s71
      %p80 = scmp.eq.s32.totalorder %s18, 0
      %p81 = por %p79, %p80
      %p82 = scmp.ne.s32.totalorder %s70, %s71
      %p83 = scmp.eq.s32.totalorder %s19, 1
      %p84 = por %p82, %p83
      %p86 = scmp.ne.s32.totalorder %s71, %s85
      %p87 = scmp.eq.s32.totalorder %s19, 0
      %p88 = por %p86, %p87
      %s90 = sadd.s32 %s89, 1
      %p93 = scmp.eq.s32.totalorder %s13, 1
      %p94 = scmp.ne.s32.totalorder %s89, %s91
      %p95 = scmp.eq.s32.totalorder %s13, 0
      %p96 = por %p94, %p95
      %p97 = scmp.ne.s32.totalorder %s89, %s91
      %p98 = scmp.eq.s32.totalorder %s18, 1
      %p99 = por %p97, %p98
      %p100 = scmp.ne.s32.totalorder %s91, %s92
      %p101 = scmp.eq.s32.totalorder %s18, 0
      %p102 = por %p100, %p101
      %p103 = scmp.ne.s32.totalorder %s91, %s92
      %p104 = scmp.eq.s32.totalorder %s19, 1
      %p105 = por %p103, %p104
      %p107 = scmp.ne.s32.totalorder %s92, %s106
      %p108 = scmp.eq.s32.totalorder %s19, 0
      %p109 = por %p107, %p108
      %s110 = ssub.s32 %s13, %s20
      %p111 = scmp.eq.s32.totalorder %s110, 0
      %s113 = sadd.s32 %s112, 1
      %s114 = scalar_select %p111, %s112, %s113
      %p117 = pneg %p111
      %p118 = scmp.eq.s32.totalorder %s13, 1
      %p119 = por %p117, %p118
      %p120 = scmp.ne.s32.totalorder %s112, %s115
      %p121 = scmp.eq.s32.totalorder %s13, 0
      %p122 = por %p120, %p121
      %p123 = scmp.ne.s32.totalorder %s112, %s115
      %p124 = scmp.eq.s32.totalorder %s18, 1
      %p125 = por %p123, %p124
      %p126 = scmp.ne.s32.totalorder %s115, %s116
      %p127 = scmp.eq.s32.totalorder %s18, 0
      %p128 = por %p126, %p127
      %p129 = scmp.ne.s32.totalorder %s115, %s116
      %p130 = scmp.eq.s32.totalorder %s19, 1
      %p131 = por %p129, %p130
      %p133 = scmp.ne.s32.totalorder %s116, %s132
      %p134 = scmp.eq.s32.totalorder %s19, 0
      %p135 = por %p133, %p134
      %s136 = ssub.s32 %s13, %s20
      %p137 = scmp.eq.s32.totalorder %s136, 0
      %s139 = sadd.s32 %s138, 1
      %s140 = scalar_select %p137, %s138, %s139
      %p143 = pneg %p137
      %p144 = scmp.eq.s32.totalorder %s13, 1
      %p145 = por %p143, %p144
      %p146 = scmp.ne.s32.totalorder %s138, %s141
      %p147 = scmp.eq.s32.totalorder %s13, 0
      %p148 = por %p146, %p147
      %p149 = scmp.ne.s32.totalorder %s138, %s141
      %p150 = scmp.eq.s32.totalorder %s18, 1
      %p151 = por %p149, %p150
      %p152 = scmp.ne.s32.totalorder %s141, %s142
      %p153 = scmp.eq.s32.totalorder %s18, 0
      %p154 = por %p152, %p153
      %p155 = scmp.ne.s32.totalorder %s141, %s142
      %p156 = scmp.eq.s32.totalorder %s19, 1
      %p157 = por %p155, %p156
      %p159 = scmp.ne.s32.totalorder %s142, %s158
      %p160 = scmp.eq.s32.totalorder %s19, 0
      %p161 = por %p159, %p160
      %p162 = scmp.le.s32.totalorder 1, %s13
      %p163 = scmp.lt.s32.totalorder %s13, 3
      %p164 = pnand %p162, %p163
      %p165 = pneg %p164
      // Predicated region
      $region9: #{graphsage_forward.4} parent=5 // pred_check
        _
      $region10: #{graphsage_forward.4} parent=5 // pred_check_branch
        %167 = sbr.rel (%p164) target = $region12
      $region11: #{graphsage_forward.4} parent=5 // pred_region
        %s168 = ssub.s32 %s13, 1
        // Predicated region
        $region13: #{graphsage_forward.4} parent=11 // pred_check
          %p169 = pneg %p60
        $region14: #{graphsage_forward.4} parent=11 // pred_check_branch
          %171 = sbr.rel (%p169) target = $region16
        $region15: #{graphsage_forward.4} parent=11 // pred_region
          _
        $region16: #{graphsage_forward.4} parent=11 // pred_fallthru
          _
        // Predicated region
        $region17: #{graphsage_forward.4} parent=11 // pred_check
          %p172 = pneg %p81
        $region18: #{graphsage_forward.4} parent=11 // pred_check_branch
          %174 = sbr.rel (%p172) target = $region20
        $region19: #{graphsage_forward.4} parent=11 // pred_region
          %s176 = ssub.s32 1024, 1024
          %177 = vsyncadd [#allocation3], %s176
          %s178 = sshll.u32 [#allocation2], 4
          %s179 = int_to_ptr.vmem [resolvable:$true] %s178
          %184 = dma.hbm_to_vmem [thread:$0]  %s2, 1024, %s179, [#allocation3], 64, 64, 4
        $region20: #{graphsage_forward.4} parent=11 // pred_fallthru
          _
        // Predicated region
        $region21: #{graphsage_forward.4} parent=11 // pred_check
          %p185 = pneg %p102
        $region22: #{graphsage_forward.4} parent=11 // pred_check_branch
          %187 = sbr.rel (%p185) target = $region24
        $region23: #{graphsage_forward.4} parent=11 // pred_region
          _
        $region24: #{graphsage_forward.4} parent=11 // pred_fallthru
          _
      $region12: #{graphsage_forward.4} parent=5 // pred_fallthru
        _
      %p188 = scmp.lt.s32.totalorder %s13, 2
      // Predicated region
      $region25: #{graphsage_forward.4} parent=5 // pred_check
        %p189 = pneg %p188
      $region26: #{graphsage_forward.4} parent=5 // pred_check_branch
        %191 = sbr.rel (%p189) target = $region28
      $region27: #{graphsage_forward.4} parent=5 // pred_region
        // Predicated region
        $region29: #{graphsage_forward.4} parent=27 // pred_check
          %p192 = pneg %p33
        $region30: #{graphsage_forward.4} parent=27 // pred_check_branch
          %194 = sbr.rel (%p192) target = $region32
        $region31: #{graphsage_forward.4} parent=27 // pred_region
          %s195 = smul.u32 8, %s13
          %p196 = scmp.lt.s32.totalorder %s195, 15
          %s197 = scalar_select %p196, %s195, 15
          %s198 = smul.addr %s197, 4
          %s199 = scalar_lea.vmem %s0, %s198
          %s200 = smul.u32 8, %s13
        $region32: #{graphsage_forward.4} parent=27 // pred_fallthru
          _
      $region28: #{graphsage_forward.4} parent=5 // pred_fallthru
        _
      %p201 = scmp.le.s32.totalorder 1, %s13
      %p202 = scmp.lt.s32.totalorder %s13, 3
      %p203 = pnand %p201, %p202
      %p204 = pneg %p203
      // Predicated region
      $region33: #{graphsage_forward.4} parent=5 // pred_check
        _
      $region34: #{graphsage_forward.4} parent=5 // pred_check_branch
        %206 = sbr.rel (%p203) target = $region36
      $region35: #{graphsage_forward.4} parent=5 // pred_region
        %s207 = ssub.s32 %s13, 1
        // Predicated region
        $region37: #{graphsage_forward.4} parent=35 // pred_check
          %p208 = pneg %p81
        $region38: #{graphsage_forward.4} parent=35 // pred_check_branch
          %210 = sbr.rel (%p208) target = $region40
        $region39: #{graphsage_forward.4} parent=35 // pred_region
          %211 = dma.done [#allocation3], 1024
        $region40: #{graphsage_forward.4} parent=35 // pred_fallthru
          _
        %s212 = smul.u32 8, %s18
        %p213 = scmp.lt.s32.totalorder %s212, 15
        %s214 = scalar_select %p213, %s212, 15
        %s215 = smul.addr %s214, 4
        %s216 = scalar_lea.vmem %s0, %s215
        %p217 = pneg %p39
        %p218 = pneg %p36
        %p219 = pneg %p60
        %p220 = pneg %p57
        %p221 = pneg %p81
        %p222 = pneg %p78
        %p223 = pneg %p102
        %p224 = pneg %p99
        %p225 = pneg %p128
        %p226 = pneg %p125
        %s227 = smul.u32 8, %s18
        %p228 = scmp.lt.s32.totalorder %s227, 15
        %s229 = scalar_select %p228, %s227, 15
        %s230 = smul.addr %s229, 4
        %s231 = scalar_lea.vmem %s4, %s230
        %p232 = pneg %p154
        %p233 = pneg %p151
        %s234 = smul.u32 8, %s18
        %p235 = scmp.lt.s32.totalorder %s234, 15
        %s236 = scalar_select %p235, %s234, 15
        %s237 = smul.addr %s236, 8
        %s238 = scalar_lea.vmem %s5, %s237
        %s239 = smul.u32 8, %s18
        %p240 = scmp.lt.s32.totalorder %s239, 15
        %s241 = scalar_select %p240, %s239, 15
        %s242 = smul.addr %s241, 4
        %s243 = scalar_lea.vmem %s0, %s242
        %s244 = smul.u32 8, %s18
        %s245 = smul.u32 8, %s18
        %p246 = scmp.lt.s32.totalorder %s245, 15
        %s247 = scalar_select %p246, %s245, 15
        %s248 = smul.addr %s247, 4
        %s249 = scalar_lea.vmem %s4, %s248
        %s250 = smul.u32 8, %s18
        %s251 = smul.u32 8, %s18
        %p252 = scmp.lt.s32.totalorder %s251, 15
        %s253 = scalar_select %p252, %s251, 15
        %s254 = smul.addr %s253, 8
        %s255 = scalar_lea.vmem %s5, %s254
        %s256 = smul.u32 8, %s18
        %v258 = vld [vmem:[%s243] sm:$0xf]
        %v259 = vld [vmem:[%s243 + $0x4] sm:$0xf]
        %v260 = vld [vmem:[%s243 + $0x8] sm:$0xf]
        %v261 = vld [vmem:[%s243 + $0xc] sm:$0xf]
        %v262 = vld [vmem:[%s243 + $0x10] sm:$0xf]
        %v263 = vld [vmem:[%s243 + $0x14] sm:$0xf]
        %v264 = vld [vmem:[%s243 + $0x18] sm:$0xf]
        %v265 = vld [vmem:[%s243 + $0x1c] sm:$0xf]
        %v266 = vld [vmem:[%s1] sm:$0xf]
        %v267 = vld [vmem:[%s1 + $0x4] sm:$0xf]
        %v268 = vld [vmem:[%s1 + $0x8] sm:$0xf]
        %v269 = vld [vmem:[%s1 + $0xc] sm:$0xf]
        %v270 = vld [vmem:[%s1 + $0x10] sm:$0xf]
        %v271 = vld [vmem:[%s1 + $0x14] sm:$0xf]
        %v272 = vld [vmem:[%s1 + $0x18] sm:$0xf]
        %v273 = vld [vmem:[%s1 + $0x1c] sm:$0xf]
        %v274 = vld [vmem:[%s1 + $0x20] sm:$0xf]
        %v275 = vld [vmem:[%s1 + $0x24] sm:$0xf]
        %v276 = vld [vmem:[%s1 + $0x28] sm:$0xf]
        %v277 = vld [vmem:[%s1 + $0x2c] sm:$0xf]
        %v278 = vld [vmem:[%s1 + $0x30] sm:$0xf]
        %v279 = vld [vmem:[%s1 + $0x34] sm:$0xf]
        %v280 = vld [vmem:[%s1 + $0x38] sm:$0xf]
        %v281 = vld [vmem:[%s1 + $0x3c] sm:$0xf]
        %v290 = vunpack.c.l.b16 %v258
        %v291 = vunpack.c.l.b16 %v259
        %v292 = vunpack.c.l.b16 %v260
        %v293 = vunpack.c.l.b16 %v261
        %v294 = vunpack.c.l.b16 %v262
        %v295 = vunpack.c.l.b16 %v263
        %v296 = vunpack.c.l.b16 %v264
        %v297 = vunpack.c.l.b16 %v265
        %v298 = vpack.c.b16 %v291, %v290
        %v299 = vpack.c.b16 %v293, %v292
        %v300 = vpack.c.b16 %v295, %v294
        %v301 = vpack.c.b16 %v297, %v296
        %v322 = vunpack.c.l.b16 %v266
        %v323 = vunpack.c.l.b16 %v267
        %v324 = vunpack.c.l.b16 %v268
        %v325 = vunpack.c.l.b16 %v269
        %v326 = vunpack.c.l.b16 %v270
        %v327 = vunpack.c.l.b16 %v271
        %v328 = vunpack.c.l.b16 %v272
        %v329 = vunpack.c.l.b16 %v273
        %v330 = vunpack.c.l.b16 %v274
        %v331 = vunpack.c.l.b16 %v275
        %v332 = vunpack.c.l.b16 %v276
        %v333 = vunpack.c.l.b16 %v277
        %v334 = vunpack.c.l.b16 %v278
        %v335 = vunpack.c.l.b16 %v279
        %v336 = vunpack.c.l.b16 %v280
        %v337 = vunpack.c.l.b16 %v281
        %v338 = vpack.c.b16 %v323, %v322
        %v339 = vpack.c.b16 %v325, %v324
        %v340 = vpack.c.b16 %v327, %v326
        %v341 = vpack.c.b16 %v329, %v328
        %v342 = vpack.c.b16 %v331, %v330
        %v343 = vpack.c.b16 %v333, %v332
        %v344 = vpack.c.b16 %v335, %v334
        %v345 = vpack.c.b16 %v337, %v336
        %354 = vmatprep.subr.bf16.mxu0 0
        %355 = vmatpush1.bf16.msra.mxu0 %v338
        %356 = vmatprep.subr.bf16.mxu0 0
        %357 = vmatpush1.bf16.msra.mxu0 %v339
        %358 = vmatprep.subr.bf16.mxu0 0
        %359 = vmatpush1.bf16.msra.mxu0 %v340
        %360 = vmatprep.subr.bf16.mxu0 0
        %361 = vmatpush1.bf16.msra.mxu0 %v341
        %362 = vmatprep.subr.bf16.mxu0 0
        %363 = vmatpush1.bf16.msra.mxu0 %v342
        %364 = vmatprep.subr.bf16.mxu0 0
        %365 = vmatpush1.bf16.msra.mxu0 %v343
        %366 = vmatprep.subr.bf16.mxu0 0
        %367 = vmatpush1.bf16.msra.mxu0 %v344
        %368 = vmatprep.subr.bf16.mxu0 0
        %369 = vmatpush1.bf16.msra.mxu0 %v345
        %370 = vmatprep.subr.bf16.mxu0 0
        %371 = vmatpush1.bf16.msra.mxu0 0
        %372 = vmatprep.subr.bf16.mxu0 0
        %373 = vmatpush1.bf16.msra.mxu0 0
        %374 = vmatprep.subr.bf16.mxu0 0
        %375 = vmatpush1.bf16.msra.mxu0 0
        %376 = vmatprep.subr.bf16.mxu0 0
        %377 = vmatpush1.bf16.msra.mxu0 0
        %378 = vmatprep.subr.bf16.mxu0 0
        %379 = vmatpush1.bf16.msra.mxu0 0
        %380 = vmatprep.subr.bf16.mxu0 0
        %381 = vmatpush1.bf16.msra.mxu0 0
        %382 = vmatprep.subr.bf16.mxu0 0
        %383 = vmatpush1.bf16.msra.mxu0 0
        %384 = vmatprep.subr.bf16.mxu0 0
        %385 = vmatpush1.bf16.msra.mxu0 0
        %386 = vmatprep.mubr.bf16.mxu0 0
        %387 = vmatmul.mubr.bf16.gmra.mrb[0].mxu0 %v298
        %v388 = vpop.f32.mrb[0].mxu0
        %v389 = vadd.f32 0.0, %v388
        %v390 = vpop.f32.mrb[0].mxu0
        %v391 = vpop.f32.mrb[0].mxu0
        %v392 = vadd.f32 0.0, %v391
        %v393 = vpop.f32.mrb[0].mxu0
        %394 = vmatprep.mubr.bf16.mxu0 0
        %395 = vmatmul.mubr.bf16.gmra.mrb[0].mxu0 %v299
        %v396 = vpop.f32.mrb[0].mxu0
        %v397 = vadd.f32 0.0, %v396
        %v398 = vpop.f32.mrb[0].mxu0
        %v399 = vpop.f32.mrb[0].mxu0
        %v400 = vadd.f32 0.0, %v399
        %v401 = vpop.f32.mrb[0].mxu0
        %402 = vmatprep.mubr.bf16.mxu0 0
        %403 = vmatmul.mubr.bf16.gmra.mrb[0].mxu0 %v300
        %v404 = vpop.f32.mrb[0].mxu0
        %v405 = vadd.f32 0.0, %v404
        %v406 = vpop.f32.mrb[0].mxu0
        %v407 = vpop.f32.mrb[0].mxu0
        %v408 = vadd.f32 0.0, %v407
        %v409 = vpop.f32.mrb[0].mxu0
        %410 = vmatprep.mubr.bf16.mxu0 0
        %411 = vmatmul.mubr.bf16.gmra.mrb[0].mxu0 %v301
        %v412 = vpop.f32.mrb[0].mxu0
        %v413 = vadd.f32 0.0, %v412
        %v414 = vpop.f32.mrb[0].mxu0
        %v415 = vpop.f32.mrb[0].mxu0
        %v416 = vadd.f32 0.0, %v415
        %v417 = vpop.f32.mrb[0].mxu0
        %418 = vdwg.mxu0
        %v419 = vpack.c.bf16 %v392, %v389
        %v420 = vpack.c.bf16 %v400, %v397
        %v421 = vpack.c.bf16 %v408, %v405
        %v422 = vpack.c.bf16 %v416, %v413
        %v427 = vunpack.c.l.b16 %v419
        %v428 = vunpack.c.h.b16 %v419
        %v429 = vunpack.c.l.b16 %v420
        %v430 = vunpack.c.h.b16 %v420
        %v431 = vunpack.c.l.b16 %v421
        %v432 = vunpack.c.h.b16 %v421
        %v433 = vunpack.c.l.b16 %v422
        %v434 = vunpack.c.h.b16 %v422
        %v435 = vpack.c.b16 %v427, %v427
        %v436 = vpack.c.b16 %v428, %v428
        %v437 = vpack.c.b16 %v429, %v429
        %v438 = vpack.c.b16 %v430, %v430
        %v439 = vpack.c.b16 %v431, %v431
        %v440 = vpack.c.b16 %v432, %v432
        %v441 = vpack.c.b16 %v433, %v433
        %v442 = vpack.c.b16 %v434, %v434
        %451 = vst [vmem:[%s249] sm:$0xf] %v435
        %452 = vst [vmem:[%s249 + $0x4] sm:$0xf] %v436
        %453 = vst [vmem:[%s249 + $0x8] sm:$0xf] %v437
        %454 = vst [vmem:[%s249 + $0xc] sm:$0xf] %v438
        %455 = vst [vmem:[%s249 + $0x10] sm:$0xf] %v439
        %456 = vst [vmem:[%s249 + $0x14] sm:$0xf] %v440
        %457 = vst [vmem:[%s249 + $0x18] sm:$0xf] %v441
        %458 = vst [vmem:[%s249 + $0x1c] sm:$0xf] %v442
        %v459 = vld [vmem:[#allocation2] sm:$0xf]
        %v460 = vld [vmem:[#allocation2 + $0x4] sm:$0xf]
        %v461 = vld [vmem:[#allocation2 + $0x8] sm:$0xf]
        %v462 = vld [vmem:[#allocation2 + $0xc] sm:$0xf]
        %v463 = vld [vmem:[#allocation2 + $0x10] sm:$0xf]
        %v464 = vld [vmem:[#allocation2 + $0x14] sm:$0xf]
        %v465 = vld [vmem:[#allocation2 + $0x18] sm:$0xf]
        %v466 = vld [vmem:[#allocation2 + $0x1c] sm:$0xf]
        %v467 = vld [vmem:[#allocation2 + $0x20] sm:$0xf]
        %v468 = vld [vmem:[#allocation2 + $0x24] sm:$0xf]
        %v469 = vld [vmem:[#allocation2 + $0x28] sm:$0xf]
        %v470 = vld [vmem:[#allocation2 + $0x2c] sm:$0xf]
        %v471 = vld [vmem:[#allocation2 + $0x30] sm:$0xf]
        %v472 = vld [vmem:[#allocation2 + $0x34] sm:$0xf]
        %v473 = vld [vmem:[#allocation2 + $0x38] sm:$0xf]
        %v474 = vld [vmem:[#allocation2 + $0x3c] sm:$0xf]
        %v475 = vld [vmem:[%s3] sm:$0x1]
        %v477 = vlaneseq
        %v478 = vshrl.u32 %v477, 7
        %v479 = vsub.s32 0, %v478
        %v480 = vrot.slane %v475, %v479
        %v498 = vunpack.c.l.b16 %v459
        %v499 = vunpack.c.l.b16 %v460
        %v500 = vunpack.c.l.b16 %v461
        %v501 = vunpack.c.l.b16 %v462
        %v502 = vunpack.c.l.b16 %v463
        %v503 = vunpack.c.l.b16 %v464
        %v504 = vunpack.c.l.b16 %v465
        %v505 = vunpack.c.l.b16 %v466
        %v506 = vunpack.c.l.b16 %v467
        %v507 = vunpack.c.l.b16 %v468
        %v508 = vunpack.c.l.b16 %v469
        %v509 = vunpack.c.l.b16 %v470
        %v510 = vunpack.c.l.b16 %v471
        %v511 = vunpack.c.l.b16 %v472
        %v512 = vunpack.c.l.b16 %v473
        %v513 = vunpack.c.l.b16 %v474
        %v514 = vpack.c.b16 %v499, %v498
        %v515 = vpack.c.b16 %v501, %v500
        %v516 = vpack.c.b16 %v503, %v502
        %v517 = vpack.c.b16 %v505, %v504
        %v518 = vpack.c.b16 %v507, %v506
        %v519 = vpack.c.b16 %v509, %v508
        %v520 = vpack.c.b16 %v511, %v510
        %v521 = vpack.c.b16 %v513, %v512
        %530 = vmatprep.subr.bf16.mxu0 0
        %531 = vmatpush1.bf16.msra.mxu0 %v514
        %532 = vmatprep.subr.bf16.mxu0 0
        %533 = vmatpush1.bf16.msra.mxu0 %v515
        %534 = vmatprep.subr.bf16.mxu0 0
        %535 = vmatpush1.bf16.msra.mxu0 %v516
        %536 = vmatprep.subr.bf16.mxu0 0
        %537 = vmatpush1.bf16.msra.mxu0 %v517
        %538 = vmatprep.subr.bf16.mxu0 0
        %539 = vmatpush1.bf16.msra.mxu0 %v518
        %540 = vmatprep.subr.bf16.mxu0 0
        %541 = vmatpush1.bf16.msra.mxu0 %v519
        %542 = vmatprep.subr.bf16.mxu0 0
        %543 = vmatpush1.bf16.msra.mxu0 %v520
        %544 = vmatprep.subr.bf16.mxu0 0
        %545 = vmatpush1.bf16.msra.mxu0 %v521
        %546 = vmatprep.subr.bf16.mxu0 0
        %547 = vmatpush1.bf16.msra.mxu0 0
        %548 = vmatprep.subr.bf16.mxu0 0
        %549 = vmatpush1.bf16.msra.mxu0 0
        %550 = vmatprep.subr.bf16.mxu0 0
        %551 = vmatpush1.bf16.msra.mxu0 0
        %552 = vmatprep.subr.bf16.mxu0 0
        %553 = vmatpush1.bf16.msra.mxu0 0
        %554 = vmatprep.subr.bf16.mxu0 0
        %555 = vmatpush1.bf16.msra.mxu0 0
        %556 = vmatprep.subr.bf16.mxu0 0
        %557 = vmatpush1.bf16.msra.mxu0 0
        %558 = vmatprep.subr.bf16.mxu0 0
        %559 = vmatpush1.bf16.msra.mxu0 0
        %560 = vmatprep.subr.bf16.mxu0 0
        %561 = vmatpush1.bf16.msra.mxu0 0
        %562 = vmatprep.mubr.bf16.mxu0 0
        %563 = vmatmul.mubr.bf16.gmra.mrb[0].mxu0 %v298
        %v564 = vpop.f32.mrb[0].mxu0
        %v565 = vadd.f32 %v480, %v564
        %v566 = vpop.f32.mrb[0].mxu0
        %v567 = vpop.f32.mrb[0].mxu0
        %v568 = vadd.f32 %v480, %v567
        %v569 = vpop.f32.mrb[0].mxu0
        %570 = vmatprep.mubr.bf16.mxu0 0
        %571 = vmatmul.mubr.bf16.gmra.mrb[0].mxu0 %v299
        %v572 = vpop.f32.mrb[0].mxu0
        %v573 = vadd.f32 %v480, %v572
        %v574 = vpop.f32.mrb[0].mxu0
        %v575 = vpop.f32.mrb[0].mxu0
        %v576 = vadd.f32 %v480, %v575
        %v577 = vpop.f32.mrb[0].mxu0
        %578 = vmatprep.mubr.bf16.mxu0 0
        %579 = vmatmul.mubr.bf16.gmra.mrb[0].mxu0 %v300
        %v580 = vpop.f32.mrb[0].mxu0
        %v581 = vadd.f32 %v480, %v580
        %v582 = vpop.f32.mrb[0].mxu0
        %v583 = vpop.f32.mrb[0].mxu0
        %v584 = vadd.f32 %v480, %v583
        %v585 = vpop.f32.mrb[0].mxu0
        %586 = vmatprep.mubr.bf16.mxu0 0
        %587 = vmatmul.mubr.bf16.gmra.mrb[0].mxu0 %v301
        %v588 = vpop.f32.mrb[0].mxu0
        %v589 = vadd.f32 %v480, %v588
        %v590 = vpop.f32.mrb[0].mxu0
        %v591 = vpop.f32.mrb[0].mxu0
        %v592 = vadd.f32 %v480, %v591
        %v593 = vpop.f32.mrb[0].mxu0
        %594 = vdwg.mxu0
        %595 = vst [vmem:[%s255] sm:$0xff] %v565
        %596 = vst [vmem:[%s255 + $0x8] sm:$0xff] %v568
        %597 = vst [vmem:[%s255 + $0x10] sm:$0xff] %v573
        %598 = vst [vmem:[%s255 + $0x18] sm:$0xff] %v576
        %599 = vst [vmem:[%s255 + $0x20] sm:$0xff] %v581
        %600 = vst [vmem:[%s255 + $0x28] sm:$0xff] %v584
        %601 = vst [vmem:[%s255 + $0x30] sm:$0xff] %v589
        %602 = vst [vmem:[%s255 + $0x38] sm:$0xff] %v592
        %s603 = smul.u32 8, %s18
        %p604 = scmp.lt.s32.totalorder %s603, 15
        %s605 = scalar_select %p604, %s603, 15
        %s606 = smul.addr %s605, 4
        %s607 = scalar_lea.vmem %s4, %s606
        %s608 = smul.u32 8, %s18
        %p609 = scmp.lt.s32.totalorder %s608, 15
        %s610 = scalar_select %p609, %s608, 15
        %s611 = smul.addr %s610, 8
        %s612 = scalar_lea.vmem %s5, %s611
        // Predicated region
        $region41: #{graphsage_forward.4} parent=35 // pred_check
          %p613 = pneg %p125
        $region42: #{graphsage_forward.4} parent=35 // pred_check_branch
          %615 = sbr.rel (%p613) target = $region44
        $region43: #{graphsage_forward.4} parent=35 // pred_region
          %s616 = smul.u32 8, %s18
        $region44: #{graphsage_forward.4} parent=35 // pred_fallthru
          _
        // Predicated region
        $region45: #{graphsage_forward.4} parent=35 // pred_check
          %p617 = pneg %p151
        $region46: #{graphsage_forward.4} parent=35 // pred_check_branch
          %619 = sbr.rel (%p617) target = $region48
        $region47: #{graphsage_forward.4} parent=35 // pred_region
          %s620 = smul.u32 8, %s18
        $region48: #{graphsage_forward.4} parent=35 // pred_fallthru
          _
      $region36: #{graphsage_forward.4} parent=5 // pred_fallthru
        _
      %p621 = scmp.le.s32.totalorder 2, %s13
      // Predicated region
      $region49: #{graphsage_forward.4} parent=5 // pred_check
        %p622 = pneg %p621
      $region50: #{graphsage_forward.4} parent=5 // pred_check_branch
        %624 = sbr.rel (%p622) target = $region52
      $region51: #{graphsage_forward.4} parent=5 // pred_region
        %s625 = ssub.s32 %s13, 2
        // Predicated region
        $region53: #{graphsage_forward.4} parent=51 // pred_check
          %p626 = pneg %p131
        $region54: #{graphsage_forward.4} parent=51 // pred_check_branch
          %628 = sbr.rel (%p626) target = $region56
        $region55: #{graphsage_forward.4} parent=51 // pred_region
          %s629 = smul.u32 8, %s19
          %p630 = scmp.lt.s32.totalorder %s629, 15
          %s631 = scalar_select %p630, %s629, 15
          %s632 = smul.addr %s631, 4
          %s633 = scalar_lea.vmem %s4, %s632
        $region56: #{graphsage_forward.4} parent=51 // pred_fallthru
          _
        // Predicated region
        $region57: #{graphsage_forward.4} parent=51 // pred_check
          %p634 = pneg %p157
        $region58: #{graphsage_forward.4} parent=51 // pred_check_branch
          %636 = sbr.rel (%p634) target = $region60
        $region59: #{graphsage_forward.4} parent=51 // pred_region
          %s637 = smul.u32 8, %s19
          %p638 = scmp.lt.s32.totalorder %s637, 15
          %s639 = scalar_select %p638, %s637, 15
          %s640 = smul.addr %s639, 8
          %s641 = scalar_lea.vmem %s5, %s640
        $region60: #{graphsage_forward.4} parent=51 // pred_fallthru
          _
      $region52: #{graphsage_forward.4} parent=5 // pred_fallthru
        _
    $region6: #{graphsage_forward.4} parent=1 // loop_footer
      %s17 = sadd.s32 1, %s13
    $region7: #{graphsage_forward.4} parent=1 // loop_footer_branch
      %12 = sbr.rel target = $region3
    $region8: #{graphsage_forward.4} parent=1 // loop_exit
      _
    %642 = vsyncpa [#allocation3], 1
    %s643 = scalar_lea.sflag [#allocation3], 1
    %644 = vsyncpa %s643, 1

// kernel: graphsage_forward.5
$region0: #{graphsage_forward.5}
  #allocation0 [shape = 'u32[]', space=smem, size = 0x4, offset = 0x4, fixed_abs, tag = 'smem constant byte address 0x4 - core index']
  #allocation1 [shape = 'u32[144,128]{1,0:T(1,128)}', space=vmem, size = 0x12000, scoped, tag = 'internal scratch']
  #allocation2 [shape = 'f32[64,128]{1,0:T(8,128)}', space=vmem, size = 0x8000, scoped, tag = 'scratch operand']
  #allocation3 [shape = 's32[1]{0}', space=sflag, size = 0x4, scoped, tag = 'scoped memory for graphsage_forward.5']
  #allocation4 [shape = 'u8[1024]{0}', space=smem, size = 0x400, scoped, tag = 'prefetched SMEM operand 0']
  #allocation5 [shape = 'u8[512]{0}', space=smem, size = 0x200, scoped, tag = 'prefetched SMEM operand 1']
  %s0 = inlined_call_operand.vmem [shape: s32[2,1], index: 0, kind: input, shape index: {}]
  %s1 = inlined_call_operand.vmem [shape: s32[2], index: 1, kind: input, shape index: {}]
  %s2 = inlined_call_operand.vmem [shape: bf16[128,128], index: 2, kind: input, shape index: {}]
  %s3 = inlined_call_operand.vmem [shape: bf16[128,128], index: 3, kind: input, shape index: {}]
  %s4 = inlined_call_operand.vmem [shape: f32[128,128], index: 4, kind: input, shape index: {}]
  %s5 = inlined_call_operand.vmem [shape: f32[128,1], index: 5, kind: input, shape index: {}]
  %s6 = inlined_call_operand.vmem [shape: bf16[128,128], index: 6, kind: output, shape index: {}]
  %s7 = sld [smem:[#allocation0]]
  $region61: #{graphsage_forward.5} parent=0
    _
  %s9 = ssub.s32 1, %s7
  %s10 = scalar_select 0, %s9, %s7
  %s11 = sshll.u32 %s0, 4
  %s12 = int_to_ptr.vmem [resolvable:$true] %s11
  %14 = dma.vmem_to_smem %s12, 32, [#allocation4], [#allocation3]
  %s15 = sshll.u32 %s1, 4
  %s16 = int_to_ptr.vmem [resolvable:$true] %s15
  %18 = dma.vmem_to_smem %s16, 16, [#allocation5], [#allocation3]
  %19 = dma.done [#allocation3], 48
  %20 = sfence
  loop: start=0, step=1, limit=4
  $region2: #{graphsage_forward.5} parent=0 // loop_pre_header
    _
  $region3: #{graphsage_forward.5} parent=0 // loop_header
    %s22 = sphi 0, %s26
    %p23 = scmp.ge.s32.totalorder %s22, 4
    %s29 = sphi 0, %s41
    %s30 = sphi 0, %s37
    %s31 = sphi 0, %s29
    %s32 = sphi 0, %s30
    %s33 = sphi 0, %s31
    %s34 = sphi 0, %s32
    %s62 = sphi 0, %s64
    %s65 = sphi 0, %s62
    %s66 = sphi 0, %s65
    %s82 = sphi 0, %s66
    %s104 = sphi 0, %s106
    %s107 = sphi 0, %s104
    %s108 = sphi 0, %s107
    %s124 = sphi 0, %s108
    %s130 = sphi 0, %s132
    %s133 = sphi 0, %s130
    %s134 = sphi 0, %s133
    %s150 = sphi 0, %s134
    %s156 = sphi 0, %s158
    %s159 = sphi 0, %s156
    %s160 = sphi 0, %s159
    %s176 = sphi 0, %s160
    %s182 = sphi 0, %s184
    %s185 = sphi 0, %s182
    %s186 = sphi 0, %s185
    %s202 = sphi 0, %s186
  $region4: #{graphsage_forward.5} parent=0 // loop_header_branch
    %25 = sbr.rel (%p23) target = $region8
  $region5: #{graphsage_forward.5} parent=0 // loop_body
    %s27 = ssub.s32 %s22, 1
    %s28 = ssub.s32 %s22, 2
    %s35 = sadd.s32 1, %s30
    %p36 = scmp.ge.s32.totalorder %s35, 1
    %s37 = scalar_select %p36, 0, %s35
    %s38 = sadd.s32 1, %s29
    %s39 = scalar_select %p36, %s38, %s29
    %p40 = scmp.ge.s32.totalorder %s39, 2
    %s41 = scalar_select %p40, 0, %s39
    %s42 = sshra.s32 %s30, 7
    %s43 = sand.u32 %s30, 127
    %s44 = sadd.s32 %s42, %s29
    %s45 = smul.u32 %s44, 128
    %s46 = sshra.s32 %s30, 7
    %s47 = sand.u32 %s30, 127
    %s48 = sadd.s32 %s45, %s47
    %s49 = sld [smem:[#allocation4 + %s48]]
    %s50 = sshra.s32 %s37, 7
    %s51 = sand.u32 %s37, 127
    %s52 = sadd.s32 %s50, %s41
    %s53 = smul.u32 %s52, 128
    %s54 = sshra.s32 %s37, 7
    %s55 = sand.u32 %s37, 127
    %s56 = sadd.s32 %s53, %s55
    %s57 = sld [smem:[#allocation4 + %s56]]
    %s58 = ssub.s32 %s29, %s41
    %s59 = ssub.s32 %s49, %s57
    %s60 = sor.u32 %s58, %s59
    %p61 = scmp.eq.s32.totalorder %s60, 0
    %s63 = sadd.s32 %s62, 1
    %s64 = scalar_select %p61, %s62, %s63
    %p67 = pneg %p61
    %p68 = scmp.eq.s32.totalorder %s22, 1
    %p69 = por %p67, %p68
    %p70 = scmp.ne.s32.totalorder %s62, %s65
    %p71 = scmp.eq.s32.totalorder %s22, 0
    %p72 = por %p70, %p71
    %p73 = scmp.ne.s32.totalorder %s62, %s65
    %p74 = scmp.eq.s32.totalorder %s27, 1
    %p75 = por %p73, %p74
    %p76 = scmp.ne.s32.totalorder %s65, %s66
    %p77 = scmp.eq.s32.totalorder %s27, 0
    %p78 = por %p76, %p77
    %p79 = scmp.ne.s32.totalorder %s65, %s66
    %p80 = scmp.eq.s32.totalorder %s28, 1
    %p81 = por %p79, %p80
    %p83 = scmp.ne.s32.totalorder %s66, %s82
    %p84 = scmp.eq.s32.totalorder %s28, 0
    %p85 = por %p83, %p84
    %s86 = sshra.s32 %s30, 7
    %s87 = sand.u32 %s30, 127
    %s88 = sadd.s32 %s86, %s29
    %s89 = smul.u32 %s88, 128
    %s90 = sshra.s32 %s30, 7
    %s91 = sand.u32 %s30, 127
    %s92 = sadd.s32 %s89, %s91
    %s93 = sld [smem:[#allocation4 + %s92]]
    %s94 = sshra.s32 %s37, 7
    %s95 = sand.u32 %s37, 127
    %s96 = sadd.s32 %s94, %s41
    %s97 = smul.u32 %s96, 128
    %s98 = sshra.s32 %s37, 7
    %s99 = sand.u32 %s37, 127
    %s100 = sadd.s32 %s97, %s99
    %s101 = sld [smem:[#allocation4 + %s100]]
    %s102 = ssub.s32 %s93, %s101
    %p103 = scmp.eq.s32.totalorder %s102, 0
    %s105 = sadd.s32 %s104, 1
    %s106 = scalar_select %p103, %s104, %s105
    %p109 = pneg %p103
    %p110 = scmp.eq.s32.totalorder %s22, 1
    %p111 = por %p109, %p110
    %p112 = scmp.ne.s32.totalorder %s104, %s107
    %p113 = scmp.eq.s32.totalorder %s22, 0
    %p114 = por %p112, %p113
    %p115 = scmp.ne.s32.totalorder %s104, %s107
    %p116 = scmp.eq.s32.totalorder %s27, 1
    %p117 = por %p115, %p116
    %p118 = scmp.ne.s32.totalorder %s107, %s108
    %p119 = scmp.eq.s32.totalorder %s27, 0
    %p120 = por %p118, %p119
    %p121 = scmp.ne.s32.totalorder %s107, %s108
    %p122 = scmp.eq.s32.totalorder %s28, 1
    %p123 = por %p121, %p122
    %p125 = scmp.ne.s32.totalorder %s108, %s124
    %p126 = scmp.eq.s32.totalorder %s28, 0
    %p127 = por %p125, %p126
    %s128 = ssub.s32 %s29, %s41
    %p129 = scmp.eq.s32.totalorder %s128, 0
    %s131 = sadd.s32 %s130, 1
    %s132 = scalar_select %p129, %s130, %s131
    %p135 = pneg %p129
    %p136 = scmp.eq.s32.totalorder %s22, 1
    %p137 = por %p135, %p136
    %p138 = scmp.ne.s32.totalorder %s130, %s133
    %p139 = scmp.eq.s32.totalorder %s22, 0
    %p140 = por %p138, %p139
    %p141 = scmp.ne.s32.totalorder %s130, %s133
    %p142 = scmp.eq.s32.totalorder %s27, 1
    %p143 = por %p141, %p142
    %p144 = scmp.ne.s32.totalorder %s133, %s134
    %p145 = scmp.eq.s32.totalorder %s27, 0
    %p146 = por %p144, %p145
    %p147 = scmp.ne.s32.totalorder %s133, %s134
    %p148 = scmp.eq.s32.totalorder %s28, 1
    %p149 = por %p147, %p148
    %p151 = scmp.ne.s32.totalorder %s134, %s150
    %p152 = scmp.eq.s32.totalorder %s28, 0
    %p153 = por %p151, %p152
    %s154 = ssub.s32 %s29, %s41
    %p155 = scmp.eq.s32.totalorder %s154, 0
    %s157 = sadd.s32 %s156, 1
    %s158 = scalar_select %p155, %s156, %s157
    %p161 = pneg %p155
    %p162 = scmp.eq.s32.totalorder %s22, 1
    %p163 = por %p161, %p162
    %p164 = scmp.ne.s32.totalorder %s156, %s159
    %p165 = scmp.eq.s32.totalorder %s22, 0
    %p166 = por %p164, %p165
    %p167 = scmp.ne.s32.totalorder %s156, %s159
    %p168 = scmp.eq.s32.totalorder %s27, 1
    %p169 = por %p167, %p168
    %p170 = scmp.ne.s32.totalorder %s159, %s160
    %p171 = scmp.eq.s32.totalorder %s27, 0
    %p172 = por %p170, %p171
    %p173 = scmp.ne.s32.totalorder %s159, %s160
    %p174 = scmp.eq.s32.totalorder %s28, 1
    %p175 = por %p173, %p174
    %p177 = scmp.ne.s32.totalorder %s160, %s176
    %p178 = scmp.eq.s32.totalorder %s28, 0
    %p179 = por %p177, %p178
    %s180 = ssub.s32 %s29, %s41
    %p181 = scmp.eq.s32.totalorder %s180, 0
    %s183 = sadd.s32 %s182, 1
    %s184 = scalar_select %p181, %s182, %s183
    %p187 = pneg %p181
    %p188 = scmp.eq.s32.totalorder %s22, 1
    %p189 = por %p187, %p188
    %p190 = scmp.ne.s32.totalorder %s182, %s185
    %p191 = scmp.eq.s32.totalorder %s22, 0
    %p192 = por %p190, %p191
    %p193 = scmp.ne.s32.totalorder %s182, %s185
    %p194 = scmp.eq.s32.totalorder %s27, 1
    %p195 = por %p193, %p194
    %p196 = scmp.ne.s32.totalorder %s185, %s186
    %p197 = scmp.eq.s32.totalorder %s27, 0
    %p198 = por %p196, %p197
    %p199 = scmp.ne.s32.totalorder %s185, %s186
    %p200 = scmp.eq.s32.totalorder %s28, 1
    %p201 = por %p199, %p200
    %p203 = scmp.ne.s32.totalorder %s186, %s202
    %p204 = scmp.eq.s32.totalorder %s28, 0
    %p205 = por %p203, %p204
    %p206 = scmp.le.s32.totalorder 1, %s22
    %p207 = scmp.lt.s32.totalorder %s22, 3
    %p208 = pnand %p206, %p207
    %p209 = pneg %p208
    // Predicated region
    $region9: #{graphsage_forward.5} parent=5 // pred_check
      _
    $region10: #{graphsage_forward.5} parent=5 // pred_check_branch
      %211 = sbr.rel (%p208) target = $region12
    $region11: #{graphsage_forward.5} parent=5 // pred_region
      %s212 = ssub.s32 %s22, 1
    $region12: #{graphsage_forward.5} parent=5 // pred_fallthru
      _
    %p213 = scmp.lt.s32.totalorder %s22, 2
    // Predicated region
    $region13: #{graphsage_forward.5} parent=5 // pred_check
      %p214 = pneg %p213
    $region14: #{graphsage_forward.5} parent=5 // pred_check_branch
      %216 = sbr.rel (%p214) target = $region16
    $region15: #{graphsage_forward.5} parent=5 // pred_region
      // Predicated region
      $region17: #{graphsage_forward.5} parent=15 // pred_check
        %p217 = pneg %p72
      $region18: #{graphsage_forward.5} parent=15 // pred_check_branch
        %219 = sbr.rel (%p217) target = $region20
      $region19: #{graphsage_forward.5} parent=15 // pred_region
        %s220 = sshra.s32 %s30, 7
        %s221 = sand.u32 %s30, 127
        %s222 = sadd.s32 %s220, %s29
        %s223 = smul.u32 %s222, 128
        %s224 = sshra.s32 %s30, 7
        %s225 = sand.u32 %s30, 127
        %s226 = sadd.s32 %s223, %s225
        %s227 = sld [smem:[#allocation4 + %s226]]
        %s228 = smul.u32 8, %s29
        %p229 = scmp.lt.s32.totalorder %s228, 15
        %s230 = scalar_select %p229, %s228, 15
        %p231 = scmp.lt.s32.totalorder %s227, 0
        %s232 = scalar_select %p231, %s227, 0
        %s233 = sadd.s32 %s232, %s230
        %s234 = smul.addr %s233, 4
        %s235 = scalar_lea.vmem %s2, %s234
        %s236 = sshra.s32 %s30, 7
        %s237 = sand.u32 %s30, 127
        %s238 = sadd.s32 %s236, %s29
        %s239 = smul.u32 %s238, 128
        %s240 = sshra.s32 %s30, 7
        %s241 = sand.u32 %s30, 127
        %s242 = sadd.s32 %s239, %s241
        %s243 = sld [smem:[#allocation4 + %s242]]
        %s244 = smul.u32 8, %s29
      $region20: #{graphsage_forward.5} parent=15 // pred_fallthru
        _
      // Predicated region
      $region21: #{graphsage_forward.5} parent=15 // pred_check
        %p245 = pneg %p114
      $region22: #{graphsage_forward.5} parent=15 // pred_check_branch
        %247 = sbr.rel (%p245) target = $region24
      $region23: #{graphsage_forward.5} parent=15 // pred_region
        %s248 = sshra.s32 %s30, 7
        %s249 = sand.u32 %s30, 127
        %s250 = sadd.s32 %s248, %s29
        %s251 = smul.u32 %s250, 128
        %s252 = sshra.s32 %s30, 7
        %s253 = sand.u32 %s30, 127
        %s254 = sadd.s32 %s251, %s253
        %s255 = sld [smem:[#allocation4 + %s254]]
        %s256 = smul.u32 16, %s255
        %p257 = scmp.lt.s32.totalorder %s256, 15
        %s258 = scalar_select %p257, %s256, 15
        %s259 = smul.addr %s258, 4
        %s260 = scalar_lea.vmem %s3, %s259
        %s261 = sshra.s32 %s30, 7
        %s262 = sand.u32 %s30, 127
        %s263 = sadd.s32 %s261, %s29
        %s264 = smul.u32 %s263, 128
        %s265 = sshra.s32 %s30, 7
        %s266 = sand.u32 %s30, 127
        %s267 = sadd.s32 %s264, %s266
        %s268 = sld [smem:[#allocation4 + %s267]]
        %s269 = smul.u32 16, %s268
      $region24: #{graphsage_forward.5} parent=15 // pred_fallthru
        _
      // Predicated region
      $region25: #{graphsage_forward.5} parent=15 // pred_check
        %p270 = pneg %p140
      $region26: #{graphsage_forward.5} parent=15 // pred_check_branch
        %272 = sbr.rel (%p270) target = $region28
      $region27: #{graphsage_forward.5} parent=15 // pred_region
        %s273 = smul.u32 8, %s29
        %p274 = scmp.lt.s32.totalorder %s273, 15
        %s275 = scalar_select %p274, %s273, 15
        %s276 = smul.addr %s275, 8
        %s277 = scalar_lea.vmem %s4, %s276
        %s278 = smul.u32 8, %s29
      $region28: #{graphsage_forward.5} parent=15 // pred_fallthru
        _
      // Predicated region
      $region29: #{graphsage_forward.5} parent=15 // pred_check
        %p279 = pneg %p166
      $region30: #{graphsage_forward.5} parent=15 // pred_check_branch
        %281 = sbr.rel (%p279) target = $region32
      $region31: #{graphsage_forward.5} parent=15 // pred_region
        %s282 = smul.u32 8, %s29
        %p283 = scmp.lt.s32.totalorder %s282, 15
        %s284 = scalar_select %p283, %s282, 15
        %s285 = smul.addr %s284, 8
        %s286 = scalar_lea.vmem %s5, %s285
        %s287 = smul.u32 8, %s29
      $region32: #{graphsage_forward.5} parent=15 // pred_fallthru
        _
    $region16: #{graphsage_forward.5} parent=5 // pred_fallthru
      _
    %p288 = scmp.le.s32.totalorder 1, %s22
    %p289 = scmp.lt.s32.totalorder %s22, 3
    %p290 = pnand %p288, %p289
    %p291 = pneg %p290
    // Predicated region
    $region33: #{graphsage_forward.5} parent=5 // pred_check
      _
    $region34: #{graphsage_forward.5} parent=5 // pred_check_branch
      %293 = sbr.rel (%p290) target = $region36
    $region35: #{graphsage_forward.5} parent=5 // pred_region
      %s294 = ssub.s32 %s22, 1
      %s295 = sshra.s32 %s32, 7
      %s296 = sand.u32 %s32, 127
      %s297 = sadd.s32 %s295, %s31
      %s298 = smul.u32 %s297, 128
      %s299 = sshra.s32 %s32, 7
      %s300 = sand.u32 %s32, 127
      %s301 = sadd.s32 %s298, %s300
      %s302 = sld [smem:[#allocation4 + %s301]]
      %s303 = smul.u32 8, %s31
      %p304 = scmp.lt.s32.totalorder %s303, 15
      %s305 = scalar_select %p304, %s303, 15
      %p306 = scmp.lt.s32.totalorder %s302, 0
      %s307 = scalar_select %p306, %s302, 0
      %s308 = sadd.s32 %s307, %s305
      %s309 = smul.addr %s308, 4
      %s310 = scalar_lea.vmem %s2, %s309
      %p311 = pneg %p78
      %p312 = pneg %p75
      %s313 = sshra.s32 %s32, 7
      %s314 = sand.u32 %s32, 127
      %s315 = sadd.s32 %s313, %s31
      %s316 = smul.u32 %s315, 128
      %s317 = sshra.s32 %s32, 7
      %s318 = sand.u32 %s32, 127
      %s319 = sadd.s32 %s316, %s318
      %s320 = sld [smem:[#allocation4 + %s319]]
      %s321 = smul.u32 16, %s320
      %p322 = scmp.lt.s32.totalorder %s321, 15
      %s323 = scalar_select %p322, %s321, 15
      %s324 = smul.addr %s323, 4
      %s325 = scalar_lea.vmem %s3, %s324
      %p326 = pneg %p120
      %p327 = pneg %p117
      %s328 = smul.u32 8, %s31
      %p329 = scmp.lt.s32.totalorder %s328, 15
      %s330 = scalar_select %p329, %s328, 15
      %s331 = smul.addr %s330, 8
      %s332 = scalar_lea.vmem %s4, %s331
      %p333 = pneg %p146
      %p334 = pneg %p143
      %s335 = smul.u32 8, %s31
      %p336 = scmp.lt.s32.totalorder %s335, 15
      %s337 = scalar_select %p336, %s335, 15
      %s338 = smul.addr %s337, 8
      %s339 = scalar_lea.vmem %s5, %s338
      %p340 = pneg %p172
      %p341 = pneg %p169
      %p342 = pneg %p198
      %p343 = pneg %p195
      %s344 = smul.u32 8, %s31
      %p345 = scmp.lt.s32.totalorder %s344, 15
      %s346 = scalar_select %p345, %s344, 15
      %s347 = smul.addr %s346, 4
      %s348 = scalar_lea.vmem %s6, %s347
      %s349 = sshra.s32 %s32, 7
      %s350 = sand.u32 %s32, 127
      %s351 = sadd.s32 %s349, %s31
      %s352 = smul.u32 %s351, 128
      %s353 = sshra.s32 %s32, 7
      %s354 = sand.u32 %s32, 127
      %s355 = sadd.s32 %s352, %s354
      %s356 = sld [smem:[#allocation4 + %s355]]
      %s357 = smul.u32 8, %s31
      %p358 = scmp.lt.s32.totalorder %s357, 15
      %s359 = scalar_select %p358, %s357, 15
      %p360 = scmp.lt.s32.totalorder %s356, 0
      %s361 = scalar_select %p360, %s356, 0
      %s362 = sadd.s32 %s361, %s359
      %s363 = smul.addr %s362, 4
      %s364 = scalar_lea.vmem %s2, %s363
      %s365 = sshra.s32 %s32, 7
      %s366 = sand.u32 %s32, 127
      %s367 = sadd.s32 %s365, %s31
      %s368 = smul.u32 %s367, 128
      %s369 = sshra.s32 %s32, 7
      %s370 = sand.u32 %s32, 127
      %s371 = sadd.s32 %s368, %s370
      %s372 = sld [smem:[#allocation4 + %s371]]
      %s373 = smul.u32 8, %s31
      %s374 = sshra.s32 %s32, 7
      %s375 = sand.u32 %s32, 127
      %s376 = sadd.s32 %s374, %s31
      %s377 = smul.u32 %s376, 128
      %s378 = sshra.s32 %s32, 7
      %s379 = sand.u32 %s32, 127
      %s380 = sadd.s32 %s377, %s379
      %s381 = sld [smem:[#allocation4 + %s380]]
      %s382 = smul.u32 16, %s381
      %p383 = scmp.lt.s32.totalorder %s382, 15
      %s384 = scalar_select %p383, %s382, 15
      %s385 = smul.addr %s384, 4
      %s386 = scalar_lea.vmem %s3, %s385
      %s387 = sshra.s32 %s32, 7
      %s388 = sand.u32 %s32, 127
      %s389 = sadd.s32 %s387, %s31
      %s390 = smul.u32 %s389, 128
      %s391 = sshra.s32 %s32, 7
      %s392 = sand.u32 %s32, 127
      %s393 = sadd.s32 %s390, %s392
      %s394 = sld [smem:[#allocation4 + %s393]]
      %s395 = smul.u32 16, %s394
      %s396 = smul.u32 8, %s31
      %p397 = scmp.lt.s32.totalorder %s396, 15
      %s398 = scalar_select %p397, %s396, 15
      %s399 = smul.addr %s398, 8
      %s400 = scalar_lea.vmem %s4, %s399
      %s401 = smul.u32 8, %s31
      %s402 = smul.u32 8, %s31
      %p403 = scmp.lt.s32.totalorder %s402, 15
      %s404 = scalar_select %p403, %s402, 15
      %s405 = smul.addr %s404, 8
      %s406 = scalar_lea.vmem %s5, %s405
      %s407 = smul.u32 8, %s31
      %s408 = smul.u32 8, %s31
      %p409 = scmp.lt.s32.totalorder %s408, 15
      %s410 = scalar_select %p409, %s408, 15
      %s411 = smul.addr %s410, 4
      %s412 = scalar_lea.vmem %s6, %s411
      %s413 = smul.u32 8, %s31
      %p415 = scmp.eq.s32.totalorder %s32, 0
      // Predicated region
      $region37: #{graphsage_forward.5} parent=35 // pred_check
        %p416 = pneg %p415
      $region38: #{graphsage_forward.5} parent=35 // pred_check_branch
        %418 = sbr.rel (%p416) target = $region40
      $region39: #{graphsage_forward.5} parent=35 // pred_region
        %419 = vst [vmem:[#allocation2] sm:$0xff] 0.0
        %420 = vst [vmem:[#allocation2 + $0x8] sm:$0xff] 0.0
        %421 = vst [vmem:[#allocation2 + $0x10] sm:$0xff] 0.0
        %422 = vst [vmem:[#allocation2 + $0x18] sm:$0xff] 0.0
        %423 = vst [vmem:[#allocation2 + $0x20] sm:$0xff] 0.0
        %424 = vst [vmem:[#allocation2 + $0x28] sm:$0xff] 0.0
        %425 = vst [vmem:[#allocation2 + $0x30] sm:$0xff] 0.0
        %426 = vst [vmem:[#allocation2 + $0x38] sm:$0xff] 0.0
      $region40: #{graphsage_forward.5} parent=35 // pred_fallthru
        _
      %s427 = sld [smem:[#allocation5 + %s31]]
      %p428 = scmp.lt.s32.totalorder %s32, %s427
      // Predicated region
      $region41: #{graphsage_forward.5} parent=35 // pred_check
        %p429 = pneg %p428
      $region42: #{graphsage_forward.5} parent=35 // pred_check_branch
        %431 = sbr.rel (%p429) target = $region44
      $region43: #{graphsage_forward.5} parent=35 // pred_region
        %v432 = vld [vmem:[#allocation2] sm:$0xff]
        %v433 = vld [vmem:[#allocation2 + $0x8] sm:$0xff]
        %v434 = vld [vmem:[#allocation2 + $0x10] sm:$0xff]
        %v435 = vld [vmem:[#allocation2 + $0x18] sm:$0xff]
        %v436 = vld [vmem:[#allocation2 + $0x20] sm:$0xff]
        %v437 = vld [vmem:[#allocation2 + $0x28] sm:$0xff]
        %v438 = vld [vmem:[#allocation2 + $0x30] sm:$0xff]
        %v439 = vld [vmem:[#allocation2 + $0x38] sm:$0xff]
        %v440 = vld [vmem:[%s364] sm:$0xf]
        %v441 = vld [vmem:[%s364 + $0x4] sm:$0xf]
        %v442 = vld [vmem:[%s364 + $0x8] sm:$0xf]
        %v443 = vld [vmem:[%s364 + $0xc] sm:$0xf]
        %v444 = vld [vmem:[%s364 + $0x10] sm:$0xf]
        %v445 = vld [vmem:[%s364 + $0x14] sm:$0xf]
        %v446 = vld [vmem:[%s364 + $0x18] sm:$0xf]
        %v447 = vld [vmem:[%s364 + $0x1c] sm:$0xf]
        %v448 = vld [vmem:[%s386] sm:$0xf]
        %v449 = vld [vmem:[%s386 + $0x4] sm:$0xf]
        %v450 = vld [vmem:[%s386 + $0x8] sm:$0xf]
        %v451 = vld [vmem:[%s386 + $0xc] sm:$0xf]
        %v452 = vld [vmem:[%s386 + $0x10] sm:$0xf]
        %v453 = vld [vmem:[%s386 + $0x14] sm:$0xf]
        %v454 = vld [vmem:[%s386 + $0x18] sm:$0xf]
        %v455 = vld [vmem:[%s386 + $0x1c] sm:$0xf]
        %v456 = vld [vmem:[%s386 + $0x20] sm:$0xf]
        %v457 = vld [vmem:[%s386 + $0x24] sm:$0xf]
        %v458 = vld [vmem:[%s386 + $0x28] sm:$0xf]
        %v459 = vld [vmem:[%s386 + $0x2c] sm:$0xf]
        %v460 = vld [vmem:[%s386 + $0x30] sm:$0xf]
        %v461 = vld [vmem:[%s386 + $0x34] sm:$0xf]
        %v462 = vld [vmem:[%s386 + $0x38] sm:$0xf]
        %v463 = vld [vmem:[%s386 + $0x3c] sm:$0xf]
        %v472 = vunpack.c.l.b16 %v440
        %v473 = vunpack.c.l.b16 %v441
        %v474 = vunpack.c.l.b16 %v442
        %v475 = vunpack.c.l.b16 %v443
        %v476 = vunpack.c.l.b16 %v444
        %v477 = vunpack.c.l.b16 %v445
        %v478 = vunpack.c.l.b16 %v446
        %v479 = vunpack.c.l.b16 %v447
        %v480 = vpack.c.b16 %v473, %v472
        %v481 = vpack.c.b16 %v475, %v474
        %v482 = vpack.c.b16 %v477, %v476
        %v483 = vpack.c.b16 %v479, %v478
        %v504 = vunpack.c.l.b16 %v448
        %v505 = vunpack.c.l.b16 %v449
        %v506 = vunpack.c.l.b16 %v450
        %v507 = vunpack.c.l.b16 %v451
        %v508 = vunpack.c.l.b16 %v452
        %v509 = vunpack.c.l.b16 %v453
        %v510 = vunpack.c.l.b16 %v454
        %v511 = vunpack.c.l.b16 %v455
        %v512 = vunpack.c.l.b16 %v456
        %v513 = vunpack.c.l.b16 %v457
        %v514 = vunpack.c.l.b16 %v458
        %v515 = vunpack.c.l.b16 %v459
        %v516 = vunpack.c.l.b16 %v460
        %v517 = vunpack.c.l.b16 %v461
        %v518 = vunpack.c.l.b16 %v462
        %v519 = vunpack.c.l.b16 %v463
        %v520 = vpack.c.b16 %v505, %v504
        %v521 = vpack.c.b16 %v507, %v506
        %v522 = vpack.c.b16 %v509, %v508
        %v523 = vpack.c.b16 %v511, %v510
        %v524 = vpack.c.b16 %v513, %v512
        %v525 = vpack.c.b16 %v515, %v514
        %v526 = vpack.c.b16 %v517, %v516
        %v527 = vpack.c.b16 %v519, %v518
        %536 = vmatprep.subr.bf16.mxu0 0
        %537 = vmatpush1.bf16.msra.mxu0 %v520
        %538 = vmatprep.subr.bf16.mxu0 0
        %539 = vmatpush1.bf16.msra.mxu0 %v521
        %540 = vmatprep.subr.bf16.mxu0 0
        %541 = vmatpush1.bf16.msra.mxu0 %v522
        %542 = vmatprep.subr.bf16.mxu0 0
        %543 = vmatpush1.bf16.msra.mxu0 %v523
        %544 = vmatprep.subr.bf16.mxu0 0
        %545 = vmatpush1.bf16.msra.mxu0 %v524
        %546 = vmatprep.subr.bf16.mxu0 0
        %547 = vmatpush1.bf16.msra.mxu0 %v525
        %548 = vmatprep.subr.bf16.mxu0 0
        %549 = vmatpush1.bf16.msra.mxu0 %v526
        %550 = vmatprep.subr.bf16.mxu0 0
        %551 = vmatpush1.bf16.msra.mxu0 %v527
        %552 = vmatprep.subr.bf16.mxu0 0
        %553 = vmatpush1.bf16.msra.mxu0 0
        %554 = vmatprep.subr.bf16.mxu0 0
        %555 = vmatpush1.bf16.msra.mxu0 0
        %556 = vmatprep.subr.bf16.mxu0 0
        %557 = vmatpush1.bf16.msra.mxu0 0
        %558 = vmatprep.subr.bf16.mxu0 0
        %559 = vmatpush1.bf16.msra.mxu0 0
        %560 = vmatprep.subr.bf16.mxu0 0
        %561 = vmatpush1.bf16.msra.mxu0 0
        %562 = vmatprep.subr.bf16.mxu0 0
        %563 = vmatpush1.bf16.msra.mxu0 0
        %564 = vmatprep.subr.bf16.mxu0 0
        %565 = vmatpush1.bf16.msra.mxu0 0
        %566 = vmatprep.subr.bf16.mxu0 0
        %567 = vmatpush1.bf16.msra.mxu0 0
        %568 = vmatprep.mubr.bf16.mxu0 0
        %569 = vmatmul.mubr.bf16.gmra.mrb[0].mxu0 %v480
        %v570 = vpop.f32.mrb[0].mxu0
        %v571 = vadd.f32 0.0, %v570
        %v572 = vpop.f32.mrb[0].mxu0
        %v573 = vpop.f32.mrb[0].mxu0
        %v574 = vadd.f32 0.0, %v573
        %v575 = vpop.f32.mrb[0].mxu0
        %576 = vmatprep.mubr.bf16.mxu0 0
        %577 = vmatmul.mubr.bf16.gmra.mrb[0].mxu0 %v481
        %v578 = vpop.f32.mrb[0].mxu0
        %v579 = vadd.f32 0.0, %v578
        %v580 = vpop.f32.mrb[0].mxu0
        %v581 = vpop.f32.mrb[0].mxu0
        %v582 = vadd.f32 0.0, %v581
        %v583 = vpop.f32.mrb[0].mxu0
        %584 = vmatprep.mubr.bf16.mxu0 0
        %585 = vmatmul.mubr.bf16.gmra.mrb[0].mxu0 %v482
        %v586 = vpop.f32.mrb[0].mxu0
        %v587 = vadd.f32 0.0, %v586
        %v588 = vpop.f32.mrb[0].mxu0
        %v589 = vpop.f32.mrb[0].mxu0
        %v590 = vadd.f32 0.0, %v589
        %v591 = vpop.f32.mrb[0].mxu0
        %592 = vmatprep.mubr.bf16.mxu0 0
        %593 = vmatmul.mubr.bf16.gmra.mrb[0].mxu0 %v483
        %v594 = vpop.f32.mrb[0].mxu0
        %v595 = vadd.f32 0.0, %v594
        %v596 = vpop.f32.mrb[0].mxu0
        %v597 = vpop.f32.mrb[0].mxu0
        %v598 = vadd.f32 0.0, %v597
        %v599 = vpop.f32.mrb[0].mxu0
        %600 = vdwg.mxu0
        %v601 = vadd.f32 %v432, %v571
        %v602 = vadd.f32 %v433, %v574
        %v603 = vadd.f32 %v434, %v579
        %v604 = vadd.f32 %v435, %v582
        %v605 = vadd.f32 %v436, %v587
        %v606 = vadd.f32 %v437, %v590
        %v607 = vadd.f32 %v438, %v595
        %v608 = vadd.f32 %v439, %v598
        %609 = vst [vmem:[#allocation2] sm:$0xff] %v601
        %610 = vst [vmem:[#allocation2 + $0x8] sm:$0xff] %v602
        %611 = vst [vmem:[#allocation2 + $0x10] sm:$0xff] %v603
        %612 = vst [vmem:[#allocation2 + $0x18] sm:$0xff] %v604
        %613 = vst [vmem:[#allocation2 + $0x20] sm:$0xff] %v605
        %614 = vst [vmem:[#allocation2 + $0x28] sm:$0xff] %v606
        %615 = vst [vmem:[#allocation2 + $0x30] sm:$0xff] %v607
        %616 = vst [vmem:[#allocation2 + $0x38] sm:$0xff] %v608
      $region44: #{graphsage_forward.5} parent=35 // pred_fallthru
        _
      // Predicated region
      $region45: #{graphsage_forward.5} parent=35 // pred_check
        %p617 = pneg %p415
      $region46: #{graphsage_forward.5} parent=35 // pred_check_branch
        %619 = sbr.rel (%p617) target = $region48
      $region47: #{graphsage_forward.5} parent=35 // pred_region
        %v620 = vld [vmem:[#allocation2] sm:$0xff]
        %v621 = vld [vmem:[#allocation2 + $0x8] sm:$0xff]
        %v622 = vld [vmem:[#allocation2 + $0x10] sm:$0xff]
        %v623 = vld [vmem:[#allocation2 + $0x18] sm:$0xff]
        %v624 = vld [vmem:[#allocation2 + $0x20] sm:$0xff]
        %v625 = vld [vmem:[#allocation2 + $0x28] sm:$0xff]
        %v626 = vld [vmem:[#allocation2 + $0x30] sm:$0xff]
        %v627 = vld [vmem:[#allocation2 + $0x38] sm:$0xff]
        %v628 = vld [vmem:[%s406] sm:$0xff]
        %v629 = vld [vmem:[%s406 + $0x8] sm:$0xff]
        %v630 = vld [vmem:[%s406 + $0x10] sm:$0xff]
        %v631 = vld [vmem:[%s406 + $0x18] sm:$0xff]
        %v632 = vld [vmem:[%s406 + $0x20] sm:$0xff]
        %v633 = vld [vmem:[%s406 + $0x28] sm:$0xff]
        %v634 = vld [vmem:[%s406 + $0x30] sm:$0xff]
        %v635 = vld [vmem:[%s406 + $0x38] sm:$0xff]
        %637 = vset.pattern.permute.xlu0 0
        %638 = vperm.xlu0 %637, %v628
        %v639 = vpop.permute.xlu0 %638
        %642 = vset.pattern.permute.xlu0 0
        %643 = vperm.xlu0 %642, %v629
        %v644 = vpop.permute.xlu0 %643
        %647 = vset.pattern.permute.xlu0 0
        %648 = vperm.xlu0 %647, %v630
        %v649 = vpop.permute.xlu0 %648
        %652 = vset.pattern.permute.xlu0 0
        %653 = vperm.xlu0 %652, %v631
        %v654 = vpop.permute.xlu0 %653
        %657 = vset.pattern.permute.xlu0 0
        %658 = vperm.xlu0 %657, %v632
        %v659 = vpop.permute.xlu0 %658
        %662 = vset.pattern.permute.xlu0 0
        %663 = vperm.xlu0 %662, %v633
        %v664 = vpop.permute.xlu0 %663
        %667 = vset.pattern.permute.xlu0 0
        %668 = vperm.xlu0 %667, %v634
        %v669 = vpop.permute.xlu0 %668
        %672 = vset.pattern.permute.xlu0 0
        %673 = vperm.xlu0 %672, %v635
        %v674 = vpop.permute.xlu0 %673
        %v676 = vmul.f32 %v620, %v639
        %v677 = vmul.f32 %v621, %v644
        %v678 = vmul.f32 %v622, %v649
        %v679 = vmul.f32 %v623, %v654
        %v680 = vmul.f32 %v624, %v659
        %v681 = vmul.f32 %v625, %v664
        %v682 = vmul.f32 %v626, %v669
        %v683 = vmul.f32 %v627, %v674
        %v684 = vld [vmem:[%s400] sm:$0xff]
        %v685 = vld [vmem:[%s400 + $0x8] sm:$0xff]
        %v686 = vld [vmem:[%s400 + $0x10] sm:$0xff]
        %v687 = vld [vmem:[%s400 + $0x18] sm:$0xff]
        %v688 = vld [vmem:[%s400 + $0x20] sm:$0xff]
        %v689 = vld [vmem:[%s400 + $0x28] sm:$0xff]
        %v690 = vld [vmem:[%s400 + $0x30] sm:$0xff]
        %v691 = vld [vmem:[%s400 + $0x38] sm:$0xff]
        %v692 = vadd.f32 %v676, %v684
        %v693 = vadd.f32 %v677, %v685
        %v694 = vadd.f32 %v678, %v686
        %v695 = vadd.f32 %v679, %v687
        %v696 = vadd.f32 %v680, %v688
        %v697 = vadd.f32 %v681, %v689
        %v698 = vadd.f32 %v682, %v690
        %v699 = vadd.f32 %v683, %v691
        %v700 = vmax.f32 %v692, 0.0
        %v701 = vmax.f32 %v693, 0.0
        %v702 = vmax.f32 %v694, 0.0
        %v703 = vmax.f32 %v695, 0.0
        %v704 = vmax.f32 %v696, 0.0
        %v705 = vmax.f32 %v697, 0.0
        %v706 = vmax.f32 %v698, 0.0
        %v707 = vmax.f32 %v699, 0.0
        %v708 = vpack.c.bf16 %v701, %v700
        %v709 = vpack.c.bf16 %v703, %v702
        %v710 = vpack.c.bf16 %v705, %v704
        %v711 = vpack.c.bf16 %v707, %v706
        %v716 = vunpack.c.l.b16 %v708
        %v717 = vunpack.c.h.b16 %v708
        %v718 = vunpack.c.l.b16 %v709
        %v719 = vunpack.c.h.b16 %v709
        %v720 = vunpack.c.l.b16 %v710
        %v721 = vunpack.c.h.b16 %v710
        %v722 = vunpack.c.l.b16 %v711
        %v723 = vunpack.c.h.b16 %v711
        %v724 = vpack.c.b16 %v716, %v716
        %v725 = vpack.c.b16 %v717, %v717
        %v726 = vpack.c.b16 %v718, %v718
        %v727 = vpack.c.b16 %v719, %v719
        %v728 = vpack.c.b16 %v720, %v720
        %v729 = vpack.c.b16 %v721, %v721
        %v730 = vpack.c.b16 %v722, %v722
        %v731 = vpack.c.b16 %v723, %v723
        %740 = vst [vmem:[%s412] sm:$0xf] %v724
        %741 = vst [vmem:[%s412 + $0x4] sm:$0xf] %v725
        %742 = vst [vmem:[%s412 + $0x8] sm:$0xf] %v726
        %743 = vst [vmem:[%s412 + $0xc] sm:$0xf] %v727
        %744 = vst [vmem:[%s412 + $0x10] sm:$0xf] %v728
        %745 = vst [vmem:[%s412 + $0x14] sm:$0xf] %v729
        %746 = vst [vmem:[%s412 + $0x18] sm:$0xf] %v730
        %747 = vst [vmem:[%s412 + $0x1c] sm:$0xf] %v731
      $region48: #{graphsage_forward.5} parent=35 // pred_fallthru
        _
      %s748 = smul.u32 8, %s31
      %p749 = scmp.lt.s32.totalorder %s748, 15
      %s750 = scalar_select %p749, %s748, 15
      %s751 = smul.addr %s750, 4
      %s752 = scalar_lea.vmem %s6, %s751
      // Predicated region
      $region49: #{graphsage_forward.5} parent=35 // pred_check
        %p753 = pneg %p195
      $region50: #{graphsage_forward.5} parent=35 // pred_check_branch
        %755 = sbr.rel (%p753) target = $region52
      $region51: #{graphsage_forward.5} parent=35 // pred_region
        %s756 = smul.u32 8, %s31
      $region52: #{graphsage_forward.5} parent=35 // pred_fallthru
        _
    $region36: #{graphsage_forward.5} parent=5 // pred_fallthru
      _
    %p757 = scmp.le.s32.totalorder 2, %s22
    // Predicated region
    $region53: #{graphsage_forward.5} parent=5 // pred_check
      %p758 = pneg %p757
    $region54: #{graphsage_forward.5} parent=5 // pred_check_branch
      %760 = sbr.rel (%p758) target = $region56
    $region55: #{graphsage_forward.5} parent=5 // pred_region
      %s761 = ssub.s32 %s22, 2
      // Predicated region
      $region57: #{graphsage_forward.5} parent=55 // pred_check
        %p762 = pneg %p201
      $region58: #{graphsage_forward.5} parent=55 // pred_check_branch
        %764 = sbr.rel (%p762) target = $region60
      $region59: #{graphsage_forward.5} parent=55 // pred_region
        %s765 = smul.u32 8, %s33
        %p766 = scmp.lt.s32.totalorder %s765, 15
        %s767 = scalar_select %p766, %s765, 15
        %s768 = smul.addr %s767, 4
        %s769 = scalar_lea.vmem %s6, %s768
      $region60: #{graphsage_forward.5} parent=55 // pred_fallthru
        _
    $region56: #{graphsage_forward.5} parent=5 // pred_fallthru
      _
  $region6: #{graphsage_forward.5} parent=0 // loop_footer
    %s26 = sadd.s32 1, %s22
  $region7: #{graphsage_forward.5} parent=0 // loop_footer_branch
    %21 = sbr.rel target = $region3
  $region8: #{graphsage_forward.5} parent=0 // loop_exit
    _

// kernel: graphsage_forward.7
$region0: #{graphsage_forward.7}
  #allocation0 [shape = 'u32[]', space=smem, size = 0x4, offset = 0x4, fixed_abs, tag = 'smem constant byte address 0x4 - core index']
  #allocation1 [shape = 'u32[144,128]{1,0:T(1,128)}', space=vmem, size = 0x12000, scoped, tag = 'internal scratch']
  #allocation2 [shape = 'f32[64,128]{1,0:T(8,128)}', space=vmem, size = 0x8000, scoped, tag = 'scratch operand']
  #allocation3 [shape = 's32[1]{0}', space=sflag, size = 0x4, scoped, tag = 'scoped memory for graphsage_forward.7']
  #allocation4 [shape = 'u8[1024]{0}', space=smem, size = 0x400, scoped, tag = 'prefetched SMEM operand 0']
  #allocation5 [shape = 'u8[512]{0}', space=smem, size = 0x200, scoped, tag = 'prefetched SMEM operand 1']
  %s0 = inlined_call_operand.vmem [shape: s32[2,1], index: 0, kind: input, shape index: {}]
  %s1 = inlined_call_operand.vmem [shape: s32[2], index: 1, kind: input, shape index: {}]
  %s2 = inlined_call_operand.vmem [shape: bf16[128,128], index: 2, kind: input, shape index: {}]
  %s3 = inlined_call_operand.vmem [shape: bf16[128,128], index: 3, kind: input, shape index: {}]
  %s4 = inlined_call_operand.vmem [shape: f32[128,128], index: 4, kind: input, shape index: {}]
  %s5 = inlined_call_operand.vmem [shape: f32[128,1], index: 5, kind: input, shape index: {}]
  %s6 = inlined_call_operand.hbm [shape: f32[128,128], index: 6, kind: output, shape index: {}]
  %s7 = sld [smem:[#allocation0]]
  $region61: #{graphsage_forward.7} parent=0
    _
  %s9 = ssub.s32 1, %s7
  %s10 = scalar_select 0, %s9, %s7
  %s11 = sshll.u32 %s0, 4
  %s12 = int_to_ptr.vmem [resolvable:$true] %s11
  %14 = dma.vmem_to_smem %s12, 32, [#allocation4], [#allocation3]
  %s15 = sshll.u32 %s1, 4
  %s16 = int_to_ptr.vmem [resolvable:$true] %s15
  %18 = dma.vmem_to_smem %s16, 16, [#allocation5], [#allocation3]
  %19 = dma.done [#allocation3], 48
  %20 = sfence
  $region1: #{graphsage_forward.7} parent=0
    #allocation6 [shape = 'u8[65536]{0}', space=vmem, size = 0x10000, scoped, tag = 'output window, operand 0']
    #allocation7 [shape = 's32[2]{0}', space=sflag, size = 0x8, scoped, tag = 'scoped memory for graphsage_forward.7']
    %21 = vsyncpa [#allocation7], 0
    %s22 = scalar_lea.sflag [#allocation7], 1
    %23 = vsyncpa %s22, 0
    loop: start=0, step=1, limit=4
    $region2: #{graphsage_forward.7} parent=1 // loop_pre_header
      _
    $region3: #{graphsage_forward.7} parent=1 // loop_header
      %s25 = sphi 0, %s29
      %p26 = scmp.ge.s32.totalorder %s25, 4
      %s32 = sphi 0, %s44
      %s33 = sphi 0, %s40
      %s34 = sphi 0, %s32
      %s35 = sphi 0, %s33
      %s36 = sphi 0, %s34
      %s37 = sphi 0, %s35
      %s65 = sphi 0, %s67
      %s68 = sphi 0, %s65
      %s69 = sphi 0, %s68
      %s85 = sphi 0, %s69
      %s107 = sphi 0, %s109
      %s110 = sphi 0, %s107
      %s111 = sphi 0, %s110
      %s127 = sphi 0, %s111
      %s133 = sphi 0, %s135
      %s136 = sphi 0, %s133
      %s137 = sphi 0, %s136
      %s153 = sphi 0, %s137
      %s159 = sphi 0, %s161
      %s162 = sphi 0, %s159
      %s163 = sphi 0, %s162
      %s179 = sphi 0, %s163
      %s185 = sphi 0, %s187
      %s188 = sphi 0, %s185
      %s189 = sphi 0, %s188
      %s205 = sphi 0, %s189
    $region4: #{graphsage_forward.7} parent=1 // loop_header_branch
      %28 = sbr.rel (%p26) target = $region8
    $region5: #{graphsage_forward.7} parent=1 // loop_body
      %s30 = ssub.s32 %s25, 1
      %s31 = ssub.s32 %s25, 2
      %s38 = sadd.s32 1, %s33
      %p39 = scmp.ge.s32.totalorder %s38, 1
      %s40 = scalar_select %p39, 0, %s38
      %s41 = sadd.s32 1, %s32
      %s42 = scalar_select %p39, %s41, %s32
      %p43 = scmp.ge.s32.totalorder %s42, 2
      %s44 = scalar_select %p43, 0, %s42
      %s45 = sshra.s32 %s33, 7
      %s46 = sand.u32 %s33, 127
      %s47 = sadd.s32 %s45, %s32
      %s48 = smul.u32 %s47, 128
      %s49 = sshra.s32 %s33, 7
      %s50 = sand.u32 %s33, 127
      %s51 = sadd.s32 %s48, %s50
      %s52 = sld [smem:[#allocation4 + %s51]]
      %s53 = sshra.s32 %s40, 7
      %s54 = sand.u32 %s40, 127
      %s55 = sadd.s32 %s53, %s44
      %s56 = smul.u32 %s55, 128
      %s57 = sshra.s32 %s40, 7
      %s58 = sand.u32 %s40, 127
      %s59 = sadd.s32 %s56, %s58
      %s60 = sld [smem:[#allocation4 + %s59]]
      %s61 = ssub.s32 %s32, %s44
      %s62 = ssub.s32 %s52, %s60
      %s63 = sor.u32 %s61, %s62
      %p64 = scmp.eq.s32.totalorder %s63, 0
      %s66 = sadd.s32 %s65, 1
      %s67 = scalar_select %p64, %s65, %s66
      %p70 = pneg %p64
      %p71 = scmp.eq.s32.totalorder %s25, 1
      %p72 = por %p70, %p71
      %p73 = scmp.ne.s32.totalorder %s65, %s68
      %p74 = scmp.eq.s32.totalorder %s25, 0
      %p75 = por %p73, %p74
      %p76 = scmp.ne.s32.totalorder %s65, %s68
      %p77 = scmp.eq.s32.totalorder %s30, 1
      %p78 = por %p76, %p77
      %p79 = scmp.ne.s32.totalorder %s68, %s69
      %p80 = scmp.eq.s32.totalorder %s30, 0
      %p81 = por %p79, %p80
      %p82 = scmp.ne.s32.totalorder %s68, %s69
      %p83 = scmp.eq.s32.totalorder %s31, 1
      %p84 = por %p82, %p83
      %p86 = scmp.ne.s32.totalorder %s69, %s85
      %p87 = scmp.eq.s32.totalorder %s31, 0
      %p88 = por %p86, %p87
      %s89 = sshra.s32 %s33, 7
      %s90 = sand.u32 %s33, 127
      %s91 = sadd.s32 %s89, %s32
      %s92 = smul.u32 %s91, 128
      %s93 = sshra.s32 %s33, 7
      %s94 = sand.u32 %s33, 127
      %s95 = sadd.s32 %s92, %s94
      %s96 = sld [smem:[#allocation4 + %s95]]
      %s97 = sshra.s32 %s40, 7
      %s98 = sand.u32 %s40, 127
      %s99 = sadd.s32 %s97, %s44
      %s100 = smul.u32 %s99, 128
      %s101 = sshra.s32 %s40, 7
      %s102 = sand.u32 %s40, 127
      %s103 = sadd.s32 %s100, %s102
      %s104 = sld [smem:[#allocation4 + %s103]]
      %s105 = ssub.s32 %s96, %s104
      %p106 = scmp.eq.s32.totalorder %s105, 0
      %s108 = sadd.s32 %s107, 1
      %s109 = scalar_select %p106, %s107, %s108
      %p112 = pneg %p106
      %p113 = scmp.eq.s32.totalorder %s25, 1
      %p114 = por %p112, %p113
      %p115 = scmp.ne.s32.totalorder %s107, %s110
      %p116 = scmp.eq.s32.totalorder %s25, 0
      %p117 = por %p115, %p116
      %p118 = scmp.ne.s32.totalorder %s107, %s110
      %p119 = scmp.eq.s32.totalorder %s30, 1
      %p120 = por %p118, %p119
      %p121 = scmp.ne.s32.totalorder %s110, %s111
      %p122 = scmp.eq.s32.totalorder %s30, 0
      %p123 = por %p121, %p122
      %p124 = scmp.ne.s32.totalorder %s110, %s111
      %p125 = scmp.eq.s32.totalorder %s31, 1
      %p126 = por %p124, %p125
      %p128 = scmp.ne.s32.totalorder %s111, %s127
      %p129 = scmp.eq.s32.totalorder %s31, 0
      %p130 = por %p128, %p129
      %s131 = ssub.s32 %s32, %s44
      %p132 = scmp.eq.s32.totalorder %s131, 0
      %s134 = sadd.s32 %s133, 1
      %s135 = scalar_select %p132, %s133, %s134
      %p138 = pneg %p132
      %p139 = scmp.eq.s32.totalorder %s25, 1
      %p140 = por %p138, %p139
      %p141 = scmp.ne.s32.totalorder %s133, %s136
      %p142 = scmp.eq.s32.totalorder %s25, 0
      %p143 = por %p141, %p142
      %p144 = scmp.ne.s32.totalorder %s133, %s136
      %p145 = scmp.eq.s32.totalorder %s30, 1
      %p146 = por %p144, %p145
      %p147 = scmp.ne.s32.totalorder %s136, %s137
      %p148 = scmp.eq.s32.totalorder %s30, 0
      %p149 = por %p147, %p148
      %p150 = scmp.ne.s32.totalorder %s136, %s137
      %p151 = scmp.eq.s32.totalorder %s31, 1
      %p152 = por %p150, %p151
      %p154 = scmp.ne.s32.totalorder %s137, %s153
      %p155 = scmp.eq.s32.totalorder %s31, 0
      %p156 = por %p154, %p155
      %s157 = ssub.s32 %s32, %s44
      %p158 = scmp.eq.s32.totalorder %s157, 0
      %s160 = sadd.s32 %s159, 1
      %s161 = scalar_select %p158, %s159, %s160
      %p164 = pneg %p158
      %p165 = scmp.eq.s32.totalorder %s25, 1
      %p166 = por %p164, %p165
      %p167 = scmp.ne.s32.totalorder %s159, %s162
      %p168 = scmp.eq.s32.totalorder %s25, 0
      %p169 = por %p167, %p168
      %p170 = scmp.ne.s32.totalorder %s159, %s162
      %p171 = scmp.eq.s32.totalorder %s30, 1
      %p172 = por %p170, %p171
      %p173 = scmp.ne.s32.totalorder %s162, %s163
      %p174 = scmp.eq.s32.totalorder %s30, 0
      %p175 = por %p173, %p174
      %p176 = scmp.ne.s32.totalorder %s162, %s163
      %p177 = scmp.eq.s32.totalorder %s31, 1
      %p178 = por %p176, %p177
      %p180 = scmp.ne.s32.totalorder %s163, %s179
      %p181 = scmp.eq.s32.totalorder %s31, 0
      %p182 = por %p180, %p181
      %s183 = ssub.s32 %s32, %s44
      %p184 = scmp.eq.s32.totalorder %s183, 0
      %s186 = sadd.s32 %s185, 1
      %s187 = scalar_select %p184, %s185, %s186
      %p190 = pneg %p184
      %p191 = scmp.eq.s32.totalorder %s25, 1
      %p192 = por %p190, %p191
      %p193 = scmp.ne.s32.totalorder %s185, %s188
      %p194 = scmp.eq.s32.totalorder %s25, 0
      %p195 = por %p193, %p194
      %p196 = scmp.ne.s32.totalorder %s185, %s188
      %p197 = scmp.eq.s32.totalorder %s30, 1
      %p198 = por %p196, %p197
      %p199 = scmp.ne.s32.totalorder %s188, %s189
      %p200 = scmp.eq.s32.totalorder %s30, 0
      %p201 = por %p199, %p200
      %p202 = scmp.ne.s32.totalorder %s188, %s189
      %p203 = scmp.eq.s32.totalorder %s31, 1
      %p204 = por %p202, %p203
      %p206 = scmp.ne.s32.totalorder %s189, %s205
      %p207 = scmp.eq.s32.totalorder %s31, 0
      %p208 = por %p206, %p207
      %p209 = scmp.le.s32.totalorder 1, %s25
      %p210 = scmp.lt.s32.totalorder %s25, 3
      %p211 = pnand %p209, %p210
      %p212 = pneg %p211
      // Predicated region
      $region9: #{graphsage_forward.7} parent=5 // pred_check
        _
      $region10: #{graphsage_forward.7} parent=5 // pred_check_branch
        %214 = sbr.rel (%p211) target = $region12
      $region11: #{graphsage_forward.7} parent=5 // pred_region
        %s215 = ssub.s32 %s25, 1
      $region12: #{graphsage_forward.7} parent=5 // pred_fallthru
        _
      %p216 = scmp.lt.s32.totalorder %s25, 2
      // Predicated region
      $region13: #{graphsage_forward.7} parent=5 // pred_check
        %p217 = pneg %p216
      $region14: #{graphsage_forward.7} parent=5 // pred_check_branch
        %219 = sbr.rel (%p217) target = $region16
      $region15: #{graphsage_forward.7} parent=5 // pred_region
        // Predicated region
        $region17: #{graphsage_forward.7} parent=15 // pred_check
          %p220 = pneg %p75
        $region18: #{graphsage_forward.7} parent=15 // pred_check_branch
          %222 = sbr.rel (%p220) target = $region20
        $region19: #{graphsage_forward.7} parent=15 // pred_region
          %s223 = sshra.s32 %s33, 7
          %s224 = sand.u32 %s33, 127
          %s225 = sadd.s32 %s223, %s32
          %s226 = smul.u32 %s225, 128
          %s227 = sshra.s32 %s33, 7
          %s228 = sand.u32 %s33, 127
          %s229 = sadd.s32 %s226, %s228
          %s230 = sld [smem:[#allocation4 + %s229]]
          %s231 = smul.u32 8, %s32
          %p232 = scmp.lt.s32.totalorder %s231, 15
          %s233 = scalar_select %p232, %s231, 15
          %p234 = scmp.lt.s32.totalorder %s230, 0
          %s235 = scalar_select %p234, %s230, 0
          %s236 = sadd.s32 %s235, %s233
          %s237 = smul.addr %s236, 4
          %s238 = scalar_lea.vmem %s2, %s237
          %s239 = sshra.s32 %s33, 7
          %s240 = sand.u32 %s33, 127
          %s241 = sadd.s32 %s239, %s32
          %s242 = smul.u32 %s241, 128
          %s243 = sshra.s32 %s33, 7
          %s244 = sand.u32 %s33, 127
          %s245 = sadd.s32 %s242, %s244
          %s246 = sld [smem:[#allocation4 + %s245]]
          %s247 = smul.u32 8, %s32
        $region20: #{graphsage_forward.7} parent=15 // pred_fallthru
          _
        // Predicated region
        $region21: #{graphsage_forward.7} parent=15 // pred_check
          %p248 = pneg %p117
        $region22: #{graphsage_forward.7} parent=15 // pred_check_branch
          %250 = sbr.rel (%p248) target = $region24
        $region23: #{graphsage_forward.7} parent=15 // pred_region
          %s251 = sshra.s32 %s33, 7
          %s252 = sand.u32 %s33, 127
          %s253 = sadd.s32 %s251, %s32
          %s254 = smul.u32 %s253, 128
          %s255 = sshra.s32 %s33, 7
          %s256 = sand.u32 %s33, 127
          %s257 = sadd.s32 %s254, %s256
          %s258 = sld [smem:[#allocation4 + %s257]]
          %s259 = smul.u32 16, %s258
          %p260 = scmp.lt.s32.totalorder %s259, 15
          %s261 = scalar_select %p260, %s259, 15
          %s262 = smul.addr %s261, 4
          %s263 = scalar_lea.vmem %s3, %s262
          %s264 = sshra.s32 %s33, 7
          %s265 = sand.u32 %s33, 127
          %s266 = sadd.s32 %s264, %s32
          %s267 = smul.u32 %s266, 128
          %s268 = sshra.s32 %s33, 7
          %s269 = sand.u32 %s33, 127
          %s270 = sadd.s32 %s267, %s269
          %s271 = sld [smem:[#allocation4 + %s270]]
          %s272 = smul.u32 16, %s271
        $region24: #{graphsage_forward.7} parent=15 // pred_fallthru
          _
        // Predicated region
        $region25: #{graphsage_forward.7} parent=15 // pred_check
          %p273 = pneg %p143
        $region26: #{graphsage_forward.7} parent=15 // pred_check_branch
          %275 = sbr.rel (%p273) target = $region28
        $region27: #{graphsage_forward.7} parent=15 // pred_region
          %s276 = smul.u32 8, %s32
          %p277 = scmp.lt.s32.totalorder %s276, 15
          %s278 = scalar_select %p277, %s276, 15
          %s279 = smul.addr %s278, 8
          %s280 = scalar_lea.vmem %s4, %s279
          %s281 = smul.u32 8, %s32
        $region28: #{graphsage_forward.7} parent=15 // pred_fallthru
          _
        // Predicated region
        $region29: #{graphsage_forward.7} parent=15 // pred_check
          %p282 = pneg %p169
        $region30: #{graphsage_forward.7} parent=15 // pred_check_branch
          %284 = sbr.rel (%p282) target = $region32
        $region31: #{graphsage_forward.7} parent=15 // pred_region
          %s285 = smul.u32 8, %s32
          %p286 = scmp.lt.s32.totalorder %s285, 15
          %s287 = scalar_select %p286, %s285, 15
          %s288 = smul.addr %s287, 8
          %s289 = scalar_lea.vmem %s5, %s288
          %s290 = smul.u32 8, %s32
        $region32: #{graphsage_forward.7} parent=15 // pred_fallthru
          _
      $region16: #{graphsage_forward.7} parent=5 // pred_fallthru
        _
      %p291 = scmp.le.s32.totalorder 1, %s25
      %p292 = scmp.lt.s32.totalorder %s25, 3
      %p293 = pnand %p291, %p292
      %p294 = pneg %p293
      // Predicated region
      $region33: #{graphsage_forward.7} parent=5 // pred_check
        _
      $region34: #{graphsage_forward.7} parent=5 // pred_check_branch
        %296 = sbr.rel (%p293) target = $region36
      $region35: #{graphsage_forward.7} parent=5 // pred_region
        %s297 = ssub.s32 %s25, 1
        %s298 = sshra.s32 %s35, 7
        %s299 = sand.u32 %s35, 127
        %s300 = sadd.s32 %s298, %s34
        %s301 = smul.u32 %s300, 128
        %s302 = sshra.s32 %s35, 7
        %s303 = sand.u32 %s35, 127
        %s304 = sadd.s32 %s301, %s303
        %s305 = sld [smem:[#allocation4 + %s304]]
        %s306 = smul.u32 8, %s34
        %p307 = scmp.lt.s32.totalorder %s306, 15
        %s308 = scalar_select %p307, %s306, 15
        %p309 = scmp.lt.s32.totalorder %s305, 0
        %s310 = scalar_select %p309, %s305, 0
        %s311 = sadd.s32 %s310, %s308
        %s312 = smul.addr %s311, 4
        %s313 = scalar_lea.vmem %s2, %s312
        %p314 = pneg %p81
        %p315 = pneg %p78
        %s316 = sshra.s32 %s35, 7
        %s317 = sand.u32 %s35, 127
        %s318 = sadd.s32 %s316, %s34
        %s319 = smul.u32 %s318, 128
        %s320 = sshra.s32 %s35, 7
        %s321 = sand.u32 %s35, 127
        %s322 = sadd.s32 %s319, %s321
        %s323 = sld [smem:[#allocation4 + %s322]]
        %s324 = smul.u32 16, %s323
        %p325 = scmp.lt.s32.totalorder %s324, 15
        %s326 = scalar_select %p325, %s324, 15
        %s327 = smul.addr %s326, 4
        %s328 = scalar_lea.vmem %s3, %s327
        %p329 = pneg %p123
        %p330 = pneg %p120
        %s331 = smul.u32 8, %s34
        %p332 = scmp.lt.s32.totalorder %s331, 15
        %s333 = scalar_select %p332, %s331, 15
        %s334 = smul.addr %s333, 8
        %s335 = scalar_lea.vmem %s4, %s334
        %p336 = pneg %p149
        %p337 = pneg %p146
        %s338 = smul.u32 8, %s34
        %p339 = scmp.lt.s32.totalorder %s338, 15
        %s340 = scalar_select %p339, %s338, 15
        %s341 = smul.addr %s340, 8
        %s342 = scalar_lea.vmem %s5, %s341
        %p343 = pneg %p175
        %p344 = pneg %p172
        %p345 = pneg %p201
        %p346 = pneg %p198
        %s347 = sand.u32 %s188, 1
        %s348 = scalar_lea.sflag [#allocation7], %s347
        %s349 = sand.u32 %s188, 1
        %s350 = smul.addr %s349, 64
        %s351 = scalar_lea.vmem [#allocation6], %s350
        %s352 = sshra.s32 %s35, 7
        %s353 = sand.u32 %s35, 127
        %s354 = sadd.s32 %s352, %s34
        %s355 = smul.u32 %s354, 128
        %s356 = sshra.s32 %s35, 7
        %s357 = sand.u32 %s35, 127
        %s358 = sadd.s32 %s355, %s357
        %s359 = sld [smem:[#allocation4 + %s358]]
        %s360 = smul.u32 8, %s34
        %p361 = scmp.lt.s32.totalorder %s360, 15
        %s362 = scalar_select %p361, %s360, 15
        %p363 = scmp.lt.s32.totalorder %s359, 0
        %s364 = scalar_select %p363, %s359, 0
        %s365 = sadd.s32 %s364, %s362
        %s366 = smul.addr %s365, 4
        %s367 = scalar_lea.vmem %s2, %s366
        %s368 = sshra.s32 %s35, 7
        %s369 = sand.u32 %s35, 127
        %s370 = sadd.s32 %s368, %s34
        %s371 = smul.u32 %s370, 128
        %s372 = sshra.s32 %s35, 7
        %s373 = sand.u32 %s35, 127
        %s374 = sadd.s32 %s371, %s373
        %s375 = sld [smem:[#allocation4 + %s374]]
        %s376 = smul.u32 8, %s34
        %s377 = sshra.s32 %s35, 7
        %s378 = sand.u32 %s35, 127
        %s379 = sadd.s32 %s377, %s34
        %s380 = smul.u32 %s379, 128
        %s381 = sshra.s32 %s35, 7
        %s382 = sand.u32 %s35, 127
        %s383 = sadd.s32 %s380, %s382
        %s384 = sld [smem:[#allocation4 + %s383]]
        %s385 = smul.u32 16, %s384
        %p386 = scmp.lt.s32.totalorder %s385, 15
        %s387 = scalar_select %p386, %s385, 15
        %s388 = smul.addr %s387, 4
        %s389 = scalar_lea.vmem %s3, %s388
        %s390 = sshra.s32 %s35, 7
        %s391 = sand.u32 %s35, 127
        %s392 = sadd.s32 %s390, %s34
        %s393 = smul.u32 %s392, 128
        %s394 = sshra.s32 %s35, 7
        %s395 = sand.u32 %s35, 127
        %s396 = sadd.s32 %s393, %s395
        %s397 = sld [smem:[#allocation4 + %s396]]
        %s398 = smul.u32 16, %s397
        %s399 = smul.u32 8, %s34
        %p400 = scmp.lt.s32.totalorder %s399, 15
        %s401 = scalar_select %p400, %s399, 15
        %s402 = smul.addr %s401, 8
        %s403 = scalar_lea.vmem %s4, %s402
        %s404 = smul.u32 8, %s34
        %s405 = smul.u32 8, %s34
        %p406 = scmp.lt.s32.totalorder %s405, 15
        %s407 = scalar_select %p406, %s405, 15
        %s408 = smul.addr %s407, 8
        %s409 = scalar_lea.vmem %s5, %s408
        %s410 = smul.u32 8, %s34
        %s411 = smul.u32 8, %s34
        %p413 = scmp.eq.s32.totalorder %s35, 0
        // Predicated region
        $region37: #{graphsage_forward.7} parent=35 // pred_check
          %p414 = pneg %p413
        $region38: #{graphsage_forward.7} parent=35 // pred_check_branch
          %416 = sbr.rel (%p414) target = $region40
        $region39: #{graphsage_forward.7} parent=35 // pred_region
          %417 = vst [vmem:[#allocation2] sm:$0xff] 0.0
          %418 = vst [vmem:[#allocation2 + $0x8] sm:$0xff] 0.0
          %419 = vst [vmem:[#allocation2 + $0x10] sm:$0xff] 0.0
          %420 = vst [vmem:[#allocation2 + $0x18] sm:$0xff] 0.0
          %421 = vst [vmem:[#allocation2 + $0x20] sm:$0xff] 0.0
          %422 = vst [vmem:[#allocation2 + $0x28] sm:$0xff] 0.0
          %423 = vst [vmem:[#allocation2 + $0x30] sm:$0xff] 0.0
          %424 = vst [vmem:[#allocation2 + $0x38] sm:$0xff] 0.0
        $region40: #{graphsage_forward.7} parent=35 // pred_fallthru
          _
        %s425 = sld [smem:[#allocation5 + %s34]]
        %p426 = scmp.lt.s32.totalorder %s35, %s425
        // Predicated region
        $region41: #{graphsage_forward.7} parent=35 // pred_check
          %p427 = pneg %p426
        $region42: #{graphsage_forward.7} parent=35 // pred_check_branch
          %429 = sbr.rel (%p427) target = $region44
        $region43: #{graphsage_forward.7} parent=35 // pred_region
          %v430 = vld [vmem:[#allocation2] sm:$0xff]
          %v431 = vld [vmem:[#allocation2 + $0x8] sm:$0xff]
          %v432 = vld [vmem:[#allocation2 + $0x10] sm:$0xff]
          %v433 = vld [vmem:[#allocation2 + $0x18] sm:$0xff]
          %v434 = vld [vmem:[#allocation2 + $0x20] sm:$0xff]
          %v435 = vld [vmem:[#allocation2 + $0x28] sm:$0xff]
          %v436 = vld [vmem:[#allocation2 + $0x30] sm:$0xff]
          %v437 = vld [vmem:[#allocation2 + $0x38] sm:$0xff]
          %v438 = vld [vmem:[%s367] sm:$0xf]
          %v439 = vld [vmem:[%s367 + $0x4] sm:$0xf]
          %v440 = vld [vmem:[%s367 + $0x8] sm:$0xf]
          %v441 = vld [vmem:[%s367 + $0xc] sm:$0xf]
          %v442 = vld [vmem:[%s367 + $0x10] sm:$0xf]
          %v443 = vld [vmem:[%s367 + $0x14] sm:$0xf]
          %v444 = vld [vmem:[%s367 + $0x18] sm:$0xf]
          %v445 = vld [vmem:[%s367 + $0x1c] sm:$0xf]
          %v446 = vld [vmem:[%s389] sm:$0xf]
          %v447 = vld [vmem:[%s389 + $0x4] sm:$0xf]
          %v448 = vld [vmem:[%s389 + $0x8] sm:$0xf]
          %v449 = vld [vmem:[%s389 + $0xc] sm:$0xf]
          %v450 = vld [vmem:[%s389 + $0x10] sm:$0xf]
          %v451 = vld [vmem:[%s389 + $0x14] sm:$0xf]
          %v452 = vld [vmem:[%s389 + $0x18] sm:$0xf]
          %v453 = vld [vmem:[%s389 + $0x1c] sm:$0xf]
          %v454 = vld [vmem:[%s389 + $0x20] sm:$0xf]
          %v455 = vld [vmem:[%s389 + $0x24] sm:$0xf]
          %v456 = vld [vmem:[%s389 + $0x28] sm:$0xf]
          %v457 = vld [vmem:[%s389 + $0x2c] sm:$0xf]
          %v458 = vld [vmem:[%s389 + $0x30] sm:$0xf]
          %v459 = vld [vmem:[%s389 + $0x34] sm:$0xf]
          %v460 = vld [vmem:[%s389 + $0x38] sm:$0xf]
          %v461 = vld [vmem:[%s389 + $0x3c] sm:$0xf]
          %v470 = vunpack.c.l.b16 %v438
          %v471 = vunpack.c.l.b16 %v439
          %v472 = vunpack.c.l.b16 %v440
          %v473 = vunpack.c.l.b16 %v441
          %v474 = vunpack.c.l.b16 %v442
          %v475 = vunpack.c.l.b16 %v443
          %v476 = vunpack.c.l.b16 %v444
          %v477 = vunpack.c.l.b16 %v445
          %v478 = vpack.c.b16 %v471, %v470
          %v479 = vpack.c.b16 %v473, %v472
          %v480 = vpack.c.b16 %v475, %v474
          %v481 = vpack.c.b16 %v477, %v476
          %v502 = vunpack.c.l.b16 %v446
          %v503 = vunpack.c.l.b16 %v447
          %v504 = vunpack.c.l.b16 %v448
          %v505 = vunpack.c.l.b16 %v449
          %v506 = vunpack.c.l.b16 %v450
          %v507 = vunpack.c.l.b16 %v451
          %v508 = vunpack.c.l.b16 %v452
          %v509 = vunpack.c.l.b16 %v453
          %v510 = vunpack.c.l.b16 %v454
          %v511 = vunpack.c.l.b16 %v455
          %v512 = vunpack.c.l.b16 %v456
          %v513 = vunpack.c.l.b16 %v457
          %v514 = vunpack.c.l.b16 %v458
          %v515 = vunpack.c.l.b16 %v459
          %v516 = vunpack.c.l.b16 %v460
          %v517 = vunpack.c.l.b16 %v461
          %v518 = vpack.c.b16 %v503, %v502
          %v519 = vpack.c.b16 %v505, %v504
          %v520 = vpack.c.b16 %v507, %v506
          %v521 = vpack.c.b16 %v509, %v508
          %v522 = vpack.c.b16 %v511, %v510
          %v523 = vpack.c.b16 %v513, %v512
          %v524 = vpack.c.b16 %v515, %v514
          %v525 = vpack.c.b16 %v517, %v516
          %534 = vmatprep.subr.bf16.mxu0 0
          %535 = vmatpush1.bf16.msra.mxu0 %v518
          %536 = vmatprep.subr.bf16.mxu0 0
          %537 = vmatpush1.bf16.msra.mxu0 %v519
          %538 = vmatprep.subr.bf16.mxu0 0
          %539 = vmatpush1.bf16.msra.mxu0 %v520
          %540 = vmatprep.subr.bf16.mxu0 0
          %541 = vmatpush1.bf16.msra.mxu0 %v521
          %542 = vmatprep.subr.bf16.mxu0 0
          %543 = vmatpush1.bf16.msra.mxu0 %v522
          %544 = vmatprep.subr.bf16.mxu0 0
          %545 = vmatpush1.bf16.msra.mxu0 %v523
          %546 = vmatprep.subr.bf16.mxu0 0
          %547 = vmatpush1.bf16.msra.mxu0 %v524
          %548 = vmatprep.subr.bf16.mxu0 0
          %549 = vmatpush1.bf16.msra.mxu0 %v525
          %550 = vmatprep.subr.bf16.mxu0 0
          %551 = vmatpush1.bf16.msra.mxu0 0
          %552 = vmatprep.subr.bf16.mxu0 0
          %553 = vmatpush1.bf16.msra.mxu0 0
          %554 = vmatprep.subr.bf16.mxu0 0
          %555 = vmatpush1.bf16.msra.mxu0 0
          %556 = vmatprep.subr.bf16.mxu0 0
          %557 = vmatpush1.bf16.msra.mxu0 0
          %558 = vmatprep.subr.bf16.mxu0 0
          %559 = vmatpush1.bf16.msra.mxu0 0
          %560 = vmatprep.subr.bf16.mxu0 0
          %561 = vmatpush1.bf16.msra.mxu0 0
          %562 = vmatprep.subr.bf16.mxu0 0
          %563 = vmatpush1.bf16.msra.mxu0 0
          %564 = vmatprep.subr.bf16.mxu0 0
          %565 = vmatpush1.bf16.msra.mxu0 0
          %566 = vmatprep.mubr.bf16.mxu0 0
          %567 = vmatmul.mubr.bf16.gmra.mrb[0].mxu0 %v478
          %v568 = vpop.f32.mrb[0].mxu0
          %v569 = vadd.f32 0.0, %v568
          %v570 = vpop.f32.mrb[0].mxu0
          %v571 = vpop.f32.mrb[0].mxu0
          %v572 = vadd.f32 0.0, %v571
          %v573 = vpop.f32.mrb[0].mxu0
          %574 = vmatprep.mubr.bf16.mxu0 0
          %575 = vmatmul.mubr.bf16.gmra.mrb[0].mxu0 %v479
          %v576 = vpop.f32.mrb[0].mxu0
          %v577 = vadd.f32 0.0, %v576
          %v578 = vpop.f32.mrb[0].mxu0
          %v579 = vpop.f32.mrb[0].mxu0
          %v580 = vadd.f32 0.0, %v579
          %v581 = vpop.f32.mrb[0].mxu0
          %582 = vmatprep.mubr.bf16.mxu0 0
          %583 = vmatmul.mubr.bf16.gmra.mrb[0].mxu0 %v480
          %v584 = vpop.f32.mrb[0].mxu0
          %v585 = vadd.f32 0.0, %v584
          %v586 = vpop.f32.mrb[0].mxu0
          %v587 = vpop.f32.mrb[0].mxu0
          %v588 = vadd.f32 0.0, %v587
          %v589 = vpop.f32.mrb[0].mxu0
          %590 = vmatprep.mubr.bf16.mxu0 0
          %591 = vmatmul.mubr.bf16.gmra.mrb[0].mxu0 %v481
          %v592 = vpop.f32.mrb[0].mxu0
          %v593 = vadd.f32 0.0, %v592
          %v594 = vpop.f32.mrb[0].mxu0
          %v595 = vpop.f32.mrb[0].mxu0
          %v596 = vadd.f32 0.0, %v595
          %v597 = vpop.f32.mrb[0].mxu0
          %598 = vdwg.mxu0
          %v599 = vadd.f32 %v430, %v569
          %v600 = vadd.f32 %v431, %v572
          %v601 = vadd.f32 %v432, %v577
          %v602 = vadd.f32 %v433, %v580
          %v603 = vadd.f32 %v434, %v585
          %v604 = vadd.f32 %v435, %v588
          %v605 = vadd.f32 %v436, %v593
          %v606 = vadd.f32 %v437, %v596
          %607 = vst [vmem:[#allocation2] sm:$0xff] %v599
          %608 = vst [vmem:[#allocation2 + $0x8] sm:$0xff] %v600
          %609 = vst [vmem:[#allocation2 + $0x10] sm:$0xff] %v601
          %610 = vst [vmem:[#allocation2 + $0x18] sm:$0xff] %v602
          %611 = vst [vmem:[#allocation2 + $0x20] sm:$0xff] %v603
          %612 = vst [vmem:[#allocation2 + $0x28] sm:$0xff] %v604
          %613 = vst [vmem:[#allocation2 + $0x30] sm:$0xff] %v605
          %614 = vst [vmem:[#allocation2 + $0x38] sm:$0xff] %v606
        $region44: #{graphsage_forward.7} parent=35 // pred_fallthru
          _
        // Predicated region
        $region45: #{graphsage_forward.7} parent=35 // pred_check
          %p615 = pneg %p413
        $region46: #{graphsage_forward.7} parent=35 // pred_check_branch
          %617 = sbr.rel (%p615) target = $region48
        $region47: #{graphsage_forward.7} parent=35 // pred_region
          %v618 = vld [vmem:[#allocation2] sm:$0xff]
          %v619 = vld [vmem:[#allocation2 + $0x8] sm:$0xff]
          %v620 = vld [vmem:[#allocation2 + $0x10] sm:$0xff]
          %v621 = vld [vmem:[#allocation2 + $0x18] sm:$0xff]
          %v622 = vld [vmem:[#allocation2 + $0x20] sm:$0xff]
          %v623 = vld [vmem:[#allocation2 + $0x28] sm:$0xff]
          %v624 = vld [vmem:[#allocation2 + $0x30] sm:$0xff]
          %v625 = vld [vmem:[#allocation2 + $0x38] sm:$0xff]
          %v626 = vld [vmem:[%s409] sm:$0xff]
          %v627 = vld [vmem:[%s409 + $0x8] sm:$0xff]
          %v628 = vld [vmem:[%s409 + $0x10] sm:$0xff]
          %v629 = vld [vmem:[%s409 + $0x18] sm:$0xff]
          %v630 = vld [vmem:[%s409 + $0x20] sm:$0xff]
          %v631 = vld [vmem:[%s409 + $0x28] sm:$0xff]
          %v632 = vld [vmem:[%s409 + $0x30] sm:$0xff]
          %v633 = vld [vmem:[%s409 + $0x38] sm:$0xff]
          %635 = vset.pattern.permute.xlu0 0
          %636 = vperm.xlu0 %635, %v626
          %v637 = vpop.permute.xlu0 %636
          %640 = vset.pattern.permute.xlu0 0
          %641 = vperm.xlu0 %640, %v627
          %v642 = vpop.permute.xlu0 %641
          %645 = vset.pattern.permute.xlu0 0
          %646 = vperm.xlu0 %645, %v628
          %v647 = vpop.permute.xlu0 %646
          %650 = vset.pattern.permute.xlu0 0
          %651 = vperm.xlu0 %650, %v629
          %v652 = vpop.permute.xlu0 %651
          %655 = vset.pattern.permute.xlu0 0
          %656 = vperm.xlu0 %655, %v630
          %v657 = vpop.permute.xlu0 %656
          %660 = vset.pattern.permute.xlu0 0
          %661 = vperm.xlu0 %660, %v631
          %v662 = vpop.permute.xlu0 %661
          %665 = vset.pattern.permute.xlu0 0
          %666 = vperm.xlu0 %665, %v632
          %v667 = vpop.permute.xlu0 %666
          %670 = vset.pattern.permute.xlu0 0
          %671 = vperm.xlu0 %670, %v633
          %v672 = vpop.permute.xlu0 %671
          %v674 = vmul.f32 %v618, %v637
          %v675 = vmul.f32 %v619, %v642
          %v676 = vmul.f32 %v620, %v647
          %v677 = vmul.f32 %v621, %v652
          %v678 = vmul.f32 %v622, %v657
          %v679 = vmul.f32 %v623, %v662
          %v680 = vmul.f32 %v624, %v667
          %v681 = vmul.f32 %v625, %v672
          %v682 = vld [vmem:[%s403] sm:$0xff]
          %v683 = vld [vmem:[%s403 + $0x8] sm:$0xff]
          %v684 = vld [vmem:[%s403 + $0x10] sm:$0xff]
          %v685 = vld [vmem:[%s403 + $0x18] sm:$0xff]
          %v686 = vld [vmem:[%s403 + $0x20] sm:$0xff]
          %v687 = vld [vmem:[%s403 + $0x28] sm:$0xff]
          %v688 = vld [vmem:[%s403 + $0x30] sm:$0xff]
          %v689 = vld [vmem:[%s403 + $0x38] sm:$0xff]
          %v690 = vadd.f32 %v674, %v682
          %v691 = vadd.f32 %v675, %v683
          %v692 = vadd.f32 %v676, %v684
          %v693 = vadd.f32 %v677, %v685
          %v694 = vadd.f32 %v678, %v686
          %v695 = vadd.f32 %v679, %v687
          %v696 = vadd.f32 %v680, %v688
          %v697 = vadd.f32 %v681, %v689
          %698 = vst [vmem:[%s351] sm:$0xff] %v690
          %699 = vst [vmem:[%s351 + $0x8] sm:$0xff] %v691
          %700 = vst [vmem:[%s351 + $0x10] sm:$0xff] %v692
          %701 = vst [vmem:[%s351 + $0x18] sm:$0xff] %v693
          %702 = vst [vmem:[%s351 + $0x20] sm:$0xff] %v694
          %703 = vst [vmem:[%s351 + $0x28] sm:$0xff] %v695
          %704 = vst [vmem:[%s351 + $0x30] sm:$0xff] %v696
          %705 = vst [vmem:[%s351 + $0x38] sm:$0xff] %v697
        $region48: #{graphsage_forward.7} parent=35 // pred_fallthru
          _
        %s706 = sand.u32 %s188, 1
        %s707 = scalar_lea.sflag [#allocation7], %s706
        %s708 = sand.u32 %s188, 1
        %s709 = smul.addr %s708, 64
        %s710 = scalar_lea.vmem [#allocation6], %s709
        // Predicated region
        $region49: #{graphsage_forward.7} parent=35 // pred_check
          %p711 = pneg %p198
        $region50: #{graphsage_forward.7} parent=35 // pred_check_branch
          %713 = sbr.rel (%p711) target = $region52
        $region51: #{graphsage_forward.7} parent=35 // pred_region
          %s714 = smul.u32 8, %s34
          %s716 = ssub.s32 1024, 1024
          %717 = vsyncadd %s707, %s716
          %s718 = smul.addr %s714, 128
          %s719 = scalar_lea.hbm %s6, %s718
          %s720 = sshll.u32 %s710, 4
          %s721 = int_to_ptr.vmem [resolvable:$true] %s720
          %726 = dma.vmem_to_hbm [thread:$0]  %s721, 1024, %s719, %s707, 128, 128, 8
        $region52: #{graphsage_forward.7} parent=35 // pred_fallthru
          _
      $region36: #{graphsage_forward.7} parent=5 // pred_fallthru
        _
      %p727 = scmp.le.s32.totalorder 2, %s25
      // Predicated region
      $region53: #{graphsage_forward.7} parent=5 // pred_check
        %p728 = pneg %p727
      $region54: #{graphsage_forward.7} parent=5 // pred_check_branch
        %730 = sbr.rel (%p728) target = $region56
      $region55: #{graphsage_forward.7} parent=5 // pred_region
        %s731 = ssub.s32 %s25, 2
        // Predicated region
        $region57: #{graphsage_forward.7} parent=55 // pred_check
          %p732 = pneg %p204
        $region58: #{graphsage_forward.7} parent=55 // pred_check_branch
          %734 = sbr.rel (%p732) target = $region60
        $region59: #{graphsage_forward.7} parent=55 // pred_region
          %s735 = sand.u32 %s189, 1
          %s736 = scalar_lea.sflag [#allocation7], %s735
          %s737 = sand.u32 %s189, 1
          %s738 = smul.addr %s737, 64
          %s739 = scalar_lea.vmem [#allocation6], %s738
          %740 = dma.done %s736, 1024
        $region60: #{graphsage_forward.7} parent=55 // pred_fallthru
          _
      $region56: #{graphsage_forward.7} parent=5 // pred_fallthru
        _
    $region6: #{graphsage_forward.7} parent=1 // loop_footer
      %s29 = sadd.s32 1, %s25
    $region7: #{graphsage_forward.7} parent=1 // loop_footer_branch
      %24 = sbr.rel target = $region3
    $region8: #{graphsage_forward.7} parent=1 // loop_exit
      _
    %741 = vsyncpa [#allocation7], 1
    %s742 = scalar_lea.sflag [#allocation7], 1
    %743 = vsyncpa %s742, 1

</llo_original>
